<compile_context>
chip_gen: v6e
topology: v6e:2x2x1
jax: 0.10.0
libtpu: 0.0.40
codegen_flags: <defaults>
</compile_context>

<pallas_src>
import functools
import math

import jax
import jax.numpy as jnp
from jax.experimental import pallas as pl
from jax.experimental.pallas import tpu as pltpu


def _lstm_recurrent_kernel(gx_ref, whh_hbm_ref, out_ref,
                           whh_vmem, h_scr, c_scr, dma_sem, *, unroll):
    """One grid step == one (batch-tile, time-block).

    Grid = (batch_tiles, time_blocks); time is the inner ("arbitrary") axis so
    the h/c VMEM scratch survives the whole time sweep of a batch tile.  The
    recurrent weight lives in HBM (memory_space=pl.ANY) and is DMA'd once per
    batch tile into a single (non-double-buffered) VMEM buffer.
    """
    t_blk = pl.program_id(1)

    @pl.when(t_blk == 0)
    def _():
        cp = pltpu.make_async_copy(whh_hbm_ref, whh_vmem, dma_sem)
        cp.start()
        h_scr[...] = jnp.zeros_like(h_scr)   # overlap state reset with the DMA
        c_scr[...] = jnp.zeros_like(c_scr)
        cp.wait()

    ts = gx_ref.shape[0]                     # timesteps in this block (static)
    H = h_scr.shape[-1]
    whh_t = whh_vmem[...]                    # (H, 4H), bf16 recurrent feed

    def sigmoid1(x):                         # single EUP push per gate
        return 0.5 * jnp.tanh(0.5 * x) + 0.5

    def step(t, carry):
        h, c = carry                         # f32 (bt, H)
        # gx_ref already holds x_t @ W_ih^T + (b_ih + b_hh); only the
        # dependent recurrent matmul is on the critical path.  bf16 MXU feed,
        # f32 accumulate.
        gates = gx_ref[t].astype(jnp.float32) + jnp.dot(
            h.astype(whh_t.dtype), whh_t, preferred_element_type=jnp.float32)
        # TODO(synk): for production sizes keep H a multiple of 128 so the
        # per-gate slices and the output store stay lane-dense.
        i_g = sigmoid1(gates[:, 0 * H:1 * H])
        f_g = sigmoid1(gates[:, 1 * H:2 * H])
        g_g = jnp.tanh(gates[:, 2 * H:3 * H])
        o_g = sigmoid1(gates[:, 3 * H:4 * H])
        c_new = f_g * c + i_g * g_g
        h_new = o_g * jnp.tanh(c_new)
        out_ref[t] = h_new.astype(out_ref.dtype)
        return (h_new, c_new)

    h, c = jax.lax.fori_loop(0, ts, step, (h_scr[...], c_scr[...]),
                             unroll=unroll)
    h_scr[...] = h
    c_scr[...] = c


def lstm_recurrence_pallas(gx, w_hh, *, time_block=32, batch_block=64,
                           recurrent_dtype=jnp.bfloat16):
    """LSTM recurrence.  gx: (S, Bp, 4H) time-major, Bp a multiple of 8,
    holding x @ W_ih^T + (b_ih + b_hh).  w_hh: (4H, H).  Returns (S, Bp, H)."""
    S, Bp, H4 = gx.shape
    H = H4 // 4

    # Pre-transpose the recurrent weight once; feed the MXU in bf16.
    whh_t = jnp.asarray(w_hh.T, recurrent_dtype)              # (H, 4H)

    # Batch tile: multiple of 8 that divides Bp -> "parallel" grid axis.
    bt = max(8, min(batch_block, Bp))
    bt -= bt % 8
    while Bp % bt:
        bt -= 8

    # Time block: pad S to a multiple of ts (padded steps are trailing and
    # never feed back into real steps; their outputs are sliced off).
    ts = min(time_block, S)
    s_pad = pl.cdiv(S, ts) * ts
    if s_pad != S:
        gx = jnp.pad(gx, ((0, s_pad - S), (0, 0), (0, 0)))

    # Full unroll only at small H; bound live ranges at large H.
    unroll = ts if H < 512 else min(ts, 8)

    gx_bytes = ts * bt * H4 * gx.dtype.itemsize
    out_bytes = ts * bt * H * gx.dtype.itemsize
    w_bytes = H * H4 * jnp.dtype(recurrent_dtype).itemsize
    hc_bytes = 2 * bt * H * 4
    vmem_limit = int(min(64 * 1024 * 1024,
                         max(2 * (gx_bytes + out_bytes) + w_bytes + hc_bytes
                             + (2 << 20), 16 * 1024 * 1024)))

    kernel = functools.partial(_lstm_recurrent_kernel, unroll=unroll)
    out = pl.pallas_call(
        kernel,
        out_shape=jax.ShapeDtypeStruct((s_pad, Bp, H), gx.dtype),
        grid_spec=pltpu.PrefetchScalarGridSpec(
            num_scalar_prefetch=0,
            grid=(Bp // bt, s_pad // ts),
            in_specs=[
                pl.BlockSpec((ts, bt, H4), lambda b, s: (s, b, 0)),  # gates_x
                pl.BlockSpec(memory_space=pl.ANY),                   # W_hh^T (HBM)
            ],
            out_specs=pl.BlockSpec((ts, bt, H), lambda b, s: (s, b, 0)),
            scratch_shapes=[
                pltpu.VMEM((H, H4), recurrent_dtype),   # resident weight, 1 buffer
                pltpu.VMEM((bt, H), jnp.float32),       # h carry
                pltpu.VMEM((bt, H), jnp.float32),       # c carry
                pltpu.SemaphoreType.DMA(()),            # weight-load semaphore
            ],
        ),
        compiler_params=pltpu.CompilerParams(
            dimension_semantics=("parallel", "arbitrary"),   # batch || , time seq
            vmem_limit_bytes=vmem_limit,
        ),
    )(gx, whh_t)
    return out[:S]


def lstm_block_forward(x_bsc, params, *, time_block=32, batch_block=64,
                       recurrent_dtype=jnp.bfloat16):
    """Full LSTMBlock forward.  x_bsc: (B, S, C) batch_first, like PyTorch."""
    B, S, C = x_bsc.shape
    Bp = ((B + 7) // 8) * 8                      # pad batch to sublane multiple
    h_sb = None
    for li, (w_ih, w_hh, b_ih, b_hh) in enumerate(params):
        bias = (b_ih + b_hh).astype(jnp.float32).reshape(1, 1, -1)
        if li == 0:
            # Fused transpose + hoisted projection: (B,S,C),(4H,C) -> (S,B,4H).
            gx = jnp.einsum('bsc,gc->sbg', x_bsc, w_ih,
                            preferred_element_type=jnp.float32)
            gx = (gx + bias).astype(x_bsc.dtype)
            if Bp != B:
                gx = jnp.pad(gx, ((0, 0), (0, Bp - B), (0, 0)))
        else:
            gx = (jnp.einsum('sbh,gh->sbg', h_sb, w_ih,
                             preferred_element_type=jnp.float32)
                  + bias).astype(h_sb.dtype)
        h_sb = lstm_recurrence_pallas(gx, w_hh, time_block=time_block,
                                      batch_block=batch_block,
                                      recurrent_dtype=recurrent_dtype)
    return jnp.transpose(h_sb[:, :B], (1, 0, 2))        # (B, S, H)


def init_lstm_params(key, channels, hidden_size, num_layers, dtype=jnp.float32):
    """Deterministic init matching nn.LSTM shapes: U(-1/sqrt(H), 1/sqrt(H))."""
    k = 1.0 / math.sqrt(hidden_size)
    params = []
    for layer in range(num_layers):
        in_dim = channels if layer == 0 else hidden_size
        key, k1, k2, k3, k4 = jax.random.split(key, 5)
        w_ih = jax.random.uniform(k1, (4 * hidden_size, in_dim), dtype, -k, k)
        w_hh = jax.random.uniform(k2, (4 * hidden_size, hidden_size), dtype, -k, k)
        b_ih = jax.random.uniform(k3, (4 * hidden_size,), dtype, -k, k)
        b_hh = jax.random.uniform(k4, (4 * hidden_size,), dtype, -k, k)
        params.append((w_ih, w_hh, b_ih, b_hh))
    return params


def lstm_block_reference(x_bsc, params):
    """Pure-JAX reference (lax.scan) for correctness checking."""
    x = jnp.transpose(x_bsc, (1, 0, 2))              # (S, B, C)
    B = x.shape[1]
    for (w_ih, w_hh, b_ih, b_hh) in params:
        H = w_hh.shape[1]
        bias = b_ih + b_hh

        def step(carry, x_t):
            h, c = carry
            gates = x_t @ w_ih.T + h @ w_hh.T + bias
            i = jax.nn.sigmoid(gates[:, 0 * H:1 * H])
            f = jax.nn.sigmoid(gates[:, 1 * H:2 * H])
            g = jnp.tanh(gates[:, 2 * H:3 * H])
            o = jax.nn.sigmoid(gates[:, 3 * H:4 * H])
            c = f * c + i * g
            h = o * jnp.tanh(c)
            return (h, c), h

        h0 = jnp.zeros((B, H), x.dtype)
        c0 = jnp.zeros((B, H), x.dtype)
        _, x = jax.lax.scan(step, (h0, c0), x)
    return jnp.transpose(x, (1, 0, 2))


if __name__ == "__main__":
    # Small shapes consistent with the module's forward: (batch, seq, channels)
    B, S, C = 2, 8, 4
    hidden_size, num_layers = 32, 2

    key = jax.random.PRNGKey(0)
    key, xk = jax.random.split(key)
    x = jax.random.normal(xk, (B, S, C), jnp.float32)
    params = init_lstm_params(key, C, hidden_size, num_layers)

    ref = jax.block_until_ready(lstm_block_reference(x, params))

    # (a) f32 recurrent feed: should track the f32 reference tightly.
    out_f32 = jax.block_until_ready(
        lstm_block_forward(x, params, recurrent_dtype=jnp.float32))
    assert out_f32.shape == (B, S, hidden_size)
    assert jnp.allclose(out_f32, ref, atol=1e-4, rtol=1e-4)

    # (b) Default (bf16 MXU feed) path: slightly looser tolerance (bf16 weights).
    out = jax.block_until_ready(lstm_block_forward(x, params))
    assert out.shape == (B, S, hidden_size)
    assert jnp.allclose(out, ref, atol=3e-2, rtol=3e-2)

    print("KERNEL_OK")
</pallas_src>

<mosaic_0001>
module attributes {stable_mosaic.version = 11 : i64} {
  func.func @_lstm_recurrent_kernel(%arg0: i32, %arg1: i32, %arg2: memref<8x8x128xf32, #tpu.memory_space<vmem>>, %arg3: memref<32x128xf32, #tpu.memory_space<any>>, %arg4: memref<8x8x32xf32, #tpu.memory_space<vmem>>, %arg5: memref<32x128xf32, #tpu.memory_space<vmem>>, %arg6: memref<8x32xf32, #tpu.memory_space<vmem>>, %arg7: memref<8x32xf32, #tpu.memory_space<vmem>>, %arg8: memref<!tpu.dma_semaphore, #tpu.memory_space<semaphore_mem>>) attributes {dimension_semantics = [#tpu.dimension_semantics<parallel>, #tpu.dimension_semantics<arbitrary>], iteration_bounds = array<i64: 1, 1>, scalar_prefetch = 0 : i64, scratch_operands = 4 : i64, tpu.core_type = #tpu.core_type<tc>, window_params = [{transform_indices = @transform_0, window_bounds = array<i64: 8, 8, 128>}, {}, {transform_indices = @transform_2, window_bounds = array<i64: 8, 8, 32>}]} {
    %c0_i32 = arith.constant 0 : i32
    %0 = arith.cmpi eq, %arg1, %c0_i32 : i32
    %1 = arith.extui %0 : i1 to i32
    %c0_i32_0 = arith.constant 0 : i32
    %2 = arith.cmpi ne, %1, %c0_i32_0 : i32
    scf.if %2 {
      tpu.enqueue_dma source(%arg3 : memref<32x128xf32, #tpu.memory_space<any>>) target(%arg5 : memref<32x128xf32, #tpu.memory_space<vmem>>) target_semaphore(%arg8 : memref<!tpu.dma_semaphore, #tpu.memory_space<semaphore_mem>>)
      %cst_122 = arith.constant 0.000000e+00 : f32
      %328 = vector.broadcast %cst_122 : f32 to vector<8x32xf32>
      %c0_123 = arith.constant 0 : index
      %c0_124 = arith.constant 0 : index
      %329 = vector.load %arg6[%c0_123, %c0_124] : memref<8x32xf32, #tpu.memory_space<vmem>>, vector<8x32xf32>
      tpu.vector_store %arg6[%c0_123, %c0_124], %328 {strides = array<i32>} : memref<8x32xf32, #tpu.memory_space<vmem>>, vector<8x32xf32>,
      %cst_125 = arith.constant 0.000000e+00 : f32
      %330 = vector.broadcast %cst_125 : f32 to vector<8x32xf32>
      %c0_126 = arith.constant 0 : index
      %c0_127 = arith.constant 0 : index
      %331 = vector.load %arg7[%c0_126, %c0_127] : memref<8x32xf32, #tpu.memory_space<vmem>>, vector<8x32xf32>
      tpu.vector_store %arg7[%c0_126, %c0_127], %330 {strides = array<i32>} : memref<8x32xf32, #tpu.memory_space<vmem>>, vector<8x32xf32>,
      tpu.wait_dma2 semaphore(%arg8 : memref<!tpu.dma_semaphore, #tpu.memory_space<semaphore_mem>>) src(%arg3 : memref<32x128xf32, #tpu.memory_space<any>>) dst(%arg5 : memref<32x128xf32, #tpu.memory_space<vmem>>)
    } else {
    }
    %c0 = arith.constant 0 : index
    %c0_1 = arith.constant 0 : index
    %3 = vector.load %arg5[%c0, %c0_1] : memref<32x128xf32, #tpu.memory_space<vmem>>, vector<32x128xf32>
    %c0_2 = arith.constant 0 : index
    %c0_3 = arith.constant 0 : index
    %4 = vector.load %arg6[%c0_2, %c0_3] : memref<8x32xf32, #tpu.memory_space<vmem>>, vector<8x32xf32>
    %c0_4 = arith.constant 0 : index
    %c0_5 = arith.constant 0 : index
    %5 = vector.load %arg7[%c0_4, %c0_5] : memref<8x32xf32, #tpu.memory_space<vmem>>, vector<8x32xf32>
    %c0_i32_6 = arith.constant 0 : i32
    %6 = arith.index_cast %c0_i32_6 : i32 to index
    %c0_7 = arith.constant 0 : index
    %c0_8 = arith.constant 0 : index
    %7 = vector.load %arg2[%6, %c0_7, %c0_8] : memref<8x8x128xf32, #tpu.memory_space<vmem>>, vector<1x8x128xf32>
    %8 = vector.shape_cast %7 : vector<1x8x128xf32> to vector<8x128xf32>
    %cst = arith.constant dense<0.000000e+00> : vector<8x128xf32>
    %9 = tpu.matmul %4, %3, %cst {dimension_numbers = #tpu.dot_dimension_numbers<[1], [0], [0], [1], [0, 0, 1, 1], [], []>} : vector<8x32xf32>, vector<32x128xf32>, vector<8x128xf32> -> vector<8x128xf32>
    %10 = arith.addf %8, %9 : vector<8x128xf32>
    %11 = vector.extract_strided_slice %10 {offsets = [0, 0], sizes = [8, 32], strides = [1, 1]} : vector<8x128xf32> to vector<8x32xf32>
    %cst_9 = arith.constant 5.000000e-01 : f32
    %12 = vector.broadcast %cst_9 : f32 to vector<8x32xf32>
    %13 = arith.mulf %12, %11 : vector<8x32xf32>
    %14 = math.tanh %13 : vector<8x32xf32>
    %cst_10 = arith.constant 5.000000e-01 : f32
    %15 = vector.broadcast %cst_10 : f32 to vector<8x32xf32>
    %16 = arith.mulf %15, %14 : vector<8x32xf32>
    %cst_11 = arith.constant 5.000000e-01 : f32
    %17 = vector.broadcast %cst_11 : f32 to vector<8x32xf32>
    %18 = arith.addf %16, %17 : vector<8x32xf32>
    %19 = vector.extract_strided_slice %10 {offsets = [0, 32], sizes = [8, 32], strides = [1, 1]} : vector<8x128xf32> to vector<8x32xf32>
    %cst_12 = arith.constant 5.000000e-01 : f32
    %20 = vector.broadcast %cst_12 : f32 to vector<8x32xf32>
    %21 = arith.mulf %20, %19 : vector<8x32xf32>
    %22 = math.tanh %21 : vector<8x32xf32>
    %cst_13 = arith.constant 5.000000e-01 : f32
    %23 = vector.broadcast %cst_13 : f32 to vector<8x32xf32>
    %24 = arith.mulf %23, %22 : vector<8x32xf32>
    %cst_14 = arith.constant 5.000000e-01 : f32
    %25 = vector.broadcast %cst_14 : f32 to vector<8x32xf32>
    %26 = arith.addf %24, %25 : vector<8x32xf32>
    %27 = vector.extract_strided_slice %10 {offsets = [0, 64], sizes = [8, 32], strides = [1, 1]} : vector<8x128xf32> to vector<8x32xf32>
    %28 = math.tanh %27 : vector<8x32xf32>
    %29 = vector.extract_strided_slice %10 {offsets = [0, 96], sizes = [8, 32], strides = [1, 1]} : vector<8x128xf32> to vector<8x32xf32>
    %cst_15 = arith.constant 5.000000e-01 : f32
    %30 = vector.broadcast %cst_15 : f32 to vector<8x32xf32>
    %31 = arith.mulf %30, %29 : vector<8x32xf32>
    %32 = math.tanh %31 : vector<8x32xf32>
    %cst_16 = arith.constant 5.000000e-01 : f32
    %33 = vector.broadcast %cst_16 : f32 to vector<8x32xf32>
    %34 = arith.mulf %33, %32 : vector<8x32xf32>
    %cst_17 = arith.constant 5.000000e-01 : f32
    %35 = vector.broadcast %cst_17 : f32 to vector<8x32xf32>
    %36 = arith.addf %34, %35 : vector<8x32xf32>
    %37 = arith.mulf %26, %5 : vector<8x32xf32>
    %38 = arith.mulf %18, %28 : vector<8x32xf32>
    %39 = arith.addf %37, %38 : vector<8x32xf32>
    %40 = math.tanh %39 : vector<8x32xf32>
    %41 = arith.mulf %36, %40 : vector<8x32xf32>
    %42 = arith.index_cast %c0_i32_6 : i32 to index
    %c0_18 = arith.constant 0 : index
    %c0_19 = arith.constant 0 : index
    %43 = vector.load %arg4[%42, %c0_18, %c0_19] : memref<8x8x32xf32, #tpu.memory_space<vmem>>, vector<1x8x32xf32>
    %44 = vector.shape_cast %43 : vector<1x8x32xf32> to vector<8x32xf32>
    %45 = vector.shape_cast %41 : vector<8x32xf32> to vector<1x8x32xf32>
    tpu.vector_store %arg4[%42, %c0_18, %c0_19], %45 {strides = array<i32>} : memref<8x8x32xf32, #tpu.memory_space<vmem>>, vector<1x8x32xf32>,
    %c1_i32 = arith.constant 1 : i32
    %46 = arith.index_cast %c1_i32 : i32 to index
    %c0_20 = arith.constant 0 : index
    %c0_21 = arith.constant 0 : index
    %47 = vector.load %arg2[%46, %c0_20, %c0_21] : memref<8x8x128xf32, #tpu.memory_space<vmem>>, vector<1x8x128xf32>
    %48 = vector.shape_cast %47 : vector<1x8x128xf32> to vector<8x128xf32>
    %cst_22 = arith.constant dense<0.000000e+00> : vector<8x128xf32>
    %49 = tpu.matmul %41, %3, %cst_22 {dimension_numbers = #tpu.dot_dimension_numbers<[1], [0], [0], [1], [0, 0, 1, 1], [], []>} : vector<8x32xf32>, vector<32x128xf32>, vector<8x128xf32> -> vector<8x128xf32>
    %50 = arith.addf %48, %49 : vector<8x128xf32>
    %51 = vector.extract_strided_slice %50 {offsets = [0, 0], sizes = [8, 32], strides = [1, 1]} : vector<8x128xf32> to vector<8x32xf32>
    %cst_23 = arith.constant 5.000000e-01 : f32
    %52 = vector.broadcast %cst_23 : f32 to vector<8x32xf32>
    %53 = arith.mulf %52, %51 : vector<8x32xf32>
    %54 = math.tanh %53 : vector<8x32xf32>
    %cst_24 = arith.constant 5.000000e-01 : f32
    %55 = vector.broadcast %cst_24 : f32 to vector<8x32xf32>
    %56 = arith.mulf %55, %54 : vector<8x32xf32>
    %cst_25 = arith.constant 5.000000e-01 : f32
    %57 = vector.broadcast %cst_25 : f32 to vector<8x32xf32>
    %58 = arith.addf %56, %57 : vector<8x32xf32>
    %59 = vector.extract_strided_slice %50 {offsets = [0, 32], sizes = [8, 32], strides = [1, 1]} : vector<8x128xf32> to vector<8x32xf32>
    %cst_26 = arith.constant 5.000000e-01 : f32
    %60 = vector.broadcast %cst_26 : f32 to vector<8x32xf32>
    %61 = arith.mulf %60, %59 : vector<8x32xf32>
    %62 = math.tanh %61 : vector<8x32xf32>
    %cst_27 = arith.constant 5.000000e-01 : f32
    %63 = vector.broadcast %cst_27 : f32 to vector<8x32xf32>
    %64 = arith.mulf %63, %62 : vector<8x32xf32>
    %cst_28 = arith.constant 5.000000e-01 : f32
    %65 = vector.broadcast %cst_28 : f32 to vector<8x32xf32>
    %66 = arith.addf %64, %65 : vector<8x32xf32>
    %67 = vector.extract_strided_slice %50 {offsets = [0, 64], sizes = [8, 32], strides = [1, 1]} : vector<8x128xf32> to vector<8x32xf32>
    %68 = math.tanh %67 : vector<8x32xf32>
    %69 = vector.extract_strided_slice %50 {offsets = [0, 96], sizes = [8, 32], strides = [1, 1]} : vector<8x128xf32> to vector<8x32xf32>
    %cst_29 = arith.constant 5.000000e-01 : f32
    %70 = vector.broadcast %cst_29 : f32 to vector<8x32xf32>
    %71 = arith.mulf %70, %69 : vector<8x32xf32>
    %72 = math.tanh %71 : vector<8x32xf32>
    %cst_30 = arith.constant 5.000000e-01 : f32
    %73 = vector.broadcast %cst_30 : f32 to vector<8x32xf32>
    %74 = arith.mulf %73, %72 : vector<8x32xf32>
    %cst_31 = arith.constant 5.000000e-01 : f32
    %75 = vector.broadcast %cst_31 : f32 to vector<8x32xf32>
    %76 = arith.addf %74, %75 : vector<8x32xf32>
    %77 = arith.mulf %66, %39 : vector<8x32xf32>
    %78 = arith.mulf %58, %68 : vector<8x32xf32>
    %79 = arith.addf %77, %78 : vector<8x32xf32>
    %80 = math.tanh %79 : vector<8x32xf32>
    %81 = arith.mulf %76, %80 : vector<8x32xf32>
    %82 = arith.index_cast %c1_i32 : i32 to index
    %c0_32 = arith.constant 0 : index
    %c0_33 = arith.constant 0 : index
    %83 = vector.load %arg4[%82, %c0_32, %c0_33] : memref<8x8x32xf32, #tpu.memory_space<vmem>>, vector<1x8x32xf32>
    %84 = vector.shape_cast %83 : vector<1x8x32xf32> to vector<8x32xf32>
    %85 = vector.shape_cast %81 : vector<8x32xf32> to vector<1x8x32xf32>
    tpu.vector_store %arg4[%82, %c0_32, %c0_33], %85 {strides = array<i32>} : memref<8x8x32xf32, #tpu.memory_space<vmem>>, vector<1x8x32xf32>,
    %c2_i32 = arith.constant 2 : i32
    %86 = arith.index_cast %c2_i32 : i32 to index
    %c0_34 = arith.constant 0 : index
    %c0_35 = arith.constant 0 : index
    %87 = vector.load %arg2[%86, %c0_34, %c0_35] : memref<8x8x128xf32, #tpu.memory_space<vmem>>, vector<1x8x128xf32>
    %88 = vector.shape_cast %87 : vector<1x8x128xf32> to vector<8x128xf32>
    %cst_36 = arith.constant dense<0.000000e+00> : vector<8x128xf32>
    %89 = tpu.matmul %81, %3, %cst_36 {dimension_numbers = #tpu.dot_dimension_numbers<[1], [0], [0], [1], [0, 0, 1, 1], [], []>} : vector<8x32xf32>, vector<32x128xf32>, vector<8x128xf32> -> vector<8x128xf32>
    %90 = arith.addf %88, %89 : vector<8x128xf32>
    %91 = vector.extract_strided_slice %90 {offsets = [0, 0], sizes = [8, 32], strides = [1, 1]} : vector<8x128xf32> to vector<8x32xf32>
    %cst_37 = arith.constant 5.000000e-01 : f32
    %92 = vector.broadcast %cst_37 : f32 to vector<8x32xf32>
    %93 = arith.mulf %92, %91 : vector<8x32xf32>
    %94 = math.tanh %93 : vector<8x32xf32>
    %cst_38 = arith.constant 5.000000e-01 : f32
    %95 = vector.broadcast %cst_38 : f32 to vector<8x32xf32>
    %96 = arith.mulf %95, %94 : vector<8x32xf32>
    %cst_39 = arith.constant 5.000000e-01 : f32
    %97 = vector.broadcast %cst_39 : f32 to vector<8x32xf32>
    %98 = arith.addf %96, %97 : vector<8x32xf32>
    %99 = vector.extract_strided_slice %90 {offsets = [0, 32], sizes = [8, 32], strides = [1, 1]} : vector<8x128xf32> to vector<8x32xf32>
    %cst_40 = arith.constant 5.000000e-01 : f32
    %100 = vector.broadcast %cst_40 : f32 to vector<8x32xf32>
    %101 = arith.mulf %100, %99 : vector<8x32xf32>
    %102 = math.tanh %101 : vector<8x32xf32>
    %cst_41 = arith.constant 5.000000e-01 : f32
    %103 = vector.broadcast %cst_41 : f32 to vector<8x32xf32>
    %104 = arith.mulf %103, %102 : vector<8x32xf32>
    %cst_42 = arith.constant 5.000000e-01 : f32
    %105 = vector.broadcast %cst_42 : f32 to vector<8x32xf32>
    %106 = arith.addf %104, %105 : vector<8x32xf32>
    %107 = vector.extract_strided_slice %90 {offsets = [0, 64], sizes = [8, 32], strides = [1, 1]} : vector<8x128xf32> to vector<8x32xf32>
    %108 = math.tanh %107 : vector<8x32xf32>
    %109 = vector.extract_strided_slice %90 {offsets = [0, 96], sizes = [8, 32], strides = [1, 1]} : vector<8x128xf32> to vector<8x32xf32>
    %cst_43 = arith.constant 5.000000e-01 : f32
    %110 = vector.broadcast %cst_43 : f32 to vector<8x32xf32>
    %111 = arith.mulf %110, %109 : vector<8x32xf32>
    %112 = math.tanh %111 : vector<8x32xf32>
    %cst_44 = arith.constant 5.000000e-01 : f32
    %113 = vector.broadcast %cst_44 : f32 to vector<8x32xf32>
    %114 = arith.mulf %113, %112 : vector<8x32xf32>
    %cst_45 = arith.constant 5.000000e-01 : f32
    %115 = vector.broadcast %cst_45 : f32 to vector<8x32xf32>
    %116 = arith.addf %114, %115 : vector<8x32xf32>
    %117 = arith.mulf %106, %79 : vector<8x32xf32>
    %118 = arith.mulf %98, %108 : vector<8x32xf32>
    %119 = arith.addf %117, %118 : vector<8x32xf32>
    %120 = math.tanh %119 : vector<8x32xf32>
    %121 = arith.mulf %116, %120 : vector<8x32xf32>
    %122 = arith.index_cast %c2_i32 : i32 to index
    %c0_46 = arith.constant 0 : index
    %c0_47 = arith.constant 0 : index
    %123 = vector.load %arg4[%122, %c0_46, %c0_47] : memref<8x8x32xf32, #tpu.memory_space<vmem>>, vector<1x8x32xf32>
    %124 = vector.shape_cast %123 : vector<1x8x32xf32> to vector<8x32xf32>
    %125 = vector.shape_cast %121 : vector<8x32xf32> to vector<1x8x32xf32>
    tpu.vector_store %arg4[%122, %c0_46, %c0_47], %125 {strides = array<i32>} : memref<8x8x32xf32, #tpu.memory_space<vmem>>, vector<1x8x32xf32>,
    %c3_i32 = arith.constant 3 : i32
    %126 = arith.index_cast %c3_i32 : i32 to index
    %c0_48 = arith.constant 0 : index
    %c0_49 = arith.constant 0 : index
    %127 = vector.load %arg2[%126, %c0_48, %c0_49] : memref<8x8x128xf32, #tpu.memory_space<vmem>>, vector<1x8x128xf32>
    %128 = vector.shape_cast %127 : vector<1x8x128xf32> to vector<8x128xf32>
    %cst_50 = arith.constant dense<0.000000e+00> : vector<8x128xf32>
    %129 = tpu.matmul %121, %3, %cst_50 {dimension_numbers = #tpu.dot_dimension_numbers<[1], [0], [0], [1], [0, 0, 1, 1], [], []>} : vector<8x32xf32>, vector<32x128xf32>, vector<8x128xf32> -> vector<8x128xf32>
    %130 = arith.addf %128, %129 : vector<8x128xf32>
    %131 = vector.extract_strided_slice %130 {offsets = [0, 0], sizes = [8, 32], strides = [1, 1]} : vector<8x128xf32> to vector<8x32xf32>
    %cst_51 = arith.constant 5.000000e-01 : f32
    %132 = vector.broadcast %cst_51 : f32 to vector<8x32xf32>
    %133 = arith.mulf %132, %131 : vector<8x32xf32>
    %134 = math.tanh %133 : vector<8x32xf32>
    %cst_52 = arith.constant 5.000000e-01 : f32
    %135 = vector.broadcast %cst_52 : f32 to vector<8x32xf32>
    %136 = arith.mulf %135, %134 : vector<8x32xf32>
    %cst_53 = arith.constant 5.000000e-01 : f32
    %137 = vector.broadcast %cst_53 : f32 to vector<8x32xf32>
    %138 = arith.addf %136, %137 : vector<8x32xf32>
    %139 = vector.extract_strided_slice %130 {offsets = [0, 32], sizes = [8, 32], strides = [1, 1]} : vector<8x128xf32> to vector<8x32xf32>
    %cst_54 = arith.constant 5.000000e-01 : f32
    %140 = vector.broadcast %cst_54 : f32 to vector<8x32xf32>
    %141 = arith.mulf %140, %139 : vector<8x32xf32>
    %142 = math.tanh %141 : vector<8x32xf32>
    %cst_55 = arith.constant 5.000000e-01 : f32
    %143 = vector.broadcast %cst_55 : f32 to vector<8x32xf32>
    %144 = arith.mulf %143, %142 : vector<8x32xf32>
    %cst_56 = arith.constant 5.000000e-01 : f32
    %145 = vector.broadcast %cst_56 : f32 to vector<8x32xf32>
    %146 = arith.addf %144, %145 : vector<8x32xf32>
    %147 = vector.extract_strided_slice %130 {offsets = [0, 64], sizes = [8, 32], strides = [1, 1]} : vector<8x128xf32> to vector<8x32xf32>
    %148 = math.tanh %147 : vector<8x32xf32>
    %149 = vector.extract_strided_slice %130 {offsets = [0, 96], sizes = [8, 32], strides = [1, 1]} : vector<8x128xf32> to vector<8x32xf32>
    %cst_57 = arith.constant 5.000000e-01 : f32
    %150 = vector.broadcast %cst_57 : f32 to vector<8x32xf32>
    %151 = arith.mulf %150, %149 : vector<8x32xf32>
    %152 = math.tanh %151 : vector<8x32xf32>
    %cst_58 = arith.constant 5.000000e-01 : f32
    %153 = vector.broadcast %cst_58 : f32 to vector<8x32xf32>
    %154 = arith.mulf %153, %152 : vector<8x32xf32>
    %cst_59 = arith.constant 5.000000e-01 : f32
    %155 = vector.broadcast %cst_59 : f32 to vector<8x32xf32>
    %156 = arith.addf %154, %155 : vector<8x32xf32>
    %157 = arith.mulf %146, %119 : vector<8x32xf32>
    %158 = arith.mulf %138, %148 : vector<8x32xf32>
    %159 = arith.addf %157, %158 : vector<8x32xf32>
    %160 = math.tanh %159 : vector<8x32xf32>
    %161 = arith.mulf %156, %160 : vector<8x32xf32>
    %162 = arith.index_cast %c3_i32 : i32 to index
    %c0_60 = arith.constant 0 : index
    %c0_61 = arith.constant 0 : index
    %163 = vector.load %arg4[%162, %c0_60, %c0_61] : memref<8x8x32xf32, #tpu.memory_space<vmem>>, vector<1x8x32xf32>
    %164 = vector.shape_cast %163 : vector<1x8x32xf32> to vector<8x32xf32>
    %165 = vector.shape_cast %161 : vector<8x32xf32> to vector<1x8x32xf32>
    tpu.vector_store %arg4[%162, %c0_60, %c0_61], %165 {strides = array<i32>} : memref<8x8x32xf32, #tpu.memory_space<vmem>>, vector<1x8x32xf32>,
    %c4_i32 = arith.constant 4 : i32
    %166 = arith.index_cast %c4_i32 : i32 to index
    %c0_62 = arith.constant 0 : index
    %c0_63 = arith.constant 0 : index
    %167 = vector.load %arg2[%166, %c0_62, %c0_63] : memref<8x8x128xf32, #tpu.memory_space<vmem>>, vector<1x8x128xf32>
    %168 = vector.shape_cast %167 : vector<1x8x128xf32> to vector<8x128xf32>
    %cst_64 = arith.constant dense<0.000000e+00> : vector<8x128xf32>
    %169 = tpu.matmul %161, %3, %cst_64 {dimension_numbers = #tpu.dot_dimension_numbers<[1], [0], [0], [1], [0, 0, 1, 1], [], []>} : vector<8x32xf32>, vector<32x128xf32>, vector<8x128xf32> -> vector<8x128xf32>
    %170 = arith.addf %168, %169 : vector<8x128xf32>
    %171 = vector.extract_strided_slice %170 {offsets = [0, 0], sizes = [8, 32], strides = [1, 1]} : vector<8x128xf32> to vector<8x32xf32>
    %cst_65 = arith.constant 5.000000e-01 : f32
    %172 = vector.broadcast %cst_65 : f32 to vector<8x32xf32>
    %173 = arith.mulf %172, %171 : vector<8x32xf32>
    %174 = math.tanh %173 : vector<8x32xf32>
    %cst_66 = arith.constant 5.000000e-01 : f32
    %175 = vector.broadcast %cst_66 : f32 to vector<8x32xf32>
    %176 = arith.mulf %175, %174 : vector<8x32xf32>
    %cst_67 = arith.constant 5.000000e-01 : f32
    %177 = vector.broadcast %cst_67 : f32 to vector<8x32xf32>
    %178 = arith.addf %176, %177 : vector<8x32xf32>
    %179 = vector.extract_strided_slice %170 {offsets = [0, 32], sizes = [8, 32], strides = [1, 1]} : vector<8x128xf32> to vector<8x32xf32>
    %cst_68 = arith.constant 5.000000e-01 : f32
    %180 = vector.broadcast %cst_68 : f32 to vector<8x32xf32>
    %181 = arith.mulf %180, %179 : vector<8x32xf32>
    %182 = math.tanh %181 : vector<8x32xf32>
    %cst_69 = arith.constant 5.000000e-01 : f32
    %183 = vector.broadcast %cst_69 : f32 to vector<8x32xf32>
    %184 = arith.mulf %183, %182 : vector<8x32xf32>
    %cst_70 = arith.constant 5.000000e-01 : f32
    %185 = vector.broadcast %cst_70 : f32 to vector<8x32xf32>
    %186 = arith.addf %184, %185 : vector<8x32xf32>
    %187 = vector.extract_strided_slice %170 {offsets = [0, 64], sizes = [8, 32], strides = [1, 1]} : vector<8x128xf32> to vector<8x32xf32>
    %188 = math.tanh %187 : vector<8x32xf32>
    %189 = vector.extract_strided_slice %170 {offsets = [0, 96], sizes = [8, 32], strides = [1, 1]} : vector<8x128xf32> to vector<8x32xf32>
    %cst_71 = arith.constant 5.000000e-01 : f32
    %190 = vector.broadcast %cst_71 : f32 to vector<8x32xf32>
    %191 = arith.mulf %190, %189 : vector<8x32xf32>
    %192 = math.tanh %191 : vector<8x32xf32>
    %cst_72 = arith.constant 5.000000e-01 : f32
    %193 = vector.broadcast %cst_72 : f32 to vector<8x32xf32>
    %194 = arith.mulf %193, %192 : vector<8x32xf32>
    %cst_73 = arith.constant 5.000000e-01 : f32
    %195 = vector.broadcast %cst_73 : f32 to vector<8x32xf32>
    %196 = arith.addf %194, %195 : vector<8x32xf32>
    %197 = arith.mulf %186, %159 : vector<8x32xf32>
    %198 = arith.mulf %178, %188 : vector<8x32xf32>
    %199 = arith.addf %197, %198 : vector<8x32xf32>
    %200 = math.tanh %199 : vector<8x32xf32>
    %201 = arith.mulf %196, %200 : vector<8x32xf32>
    %202 = arith.index_cast %c4_i32 : i32 to index
    %c0_74 = arith.constant 0 : index
    %c0_75 = arith.constant 0 : index
    %203 = vector.load %arg4[%202, %c0_74, %c0_75] : memref<8x8x32xf32, #tpu.memory_space<vmem>>, vector<1x8x32xf32>
    %204 = vector.shape_cast %203 : vector<1x8x32xf32> to vector<8x32xf32>
    %205 = vector.shape_cast %201 : vector<8x32xf32> to vector<1x8x32xf32>
    tpu.vector_store %arg4[%202, %c0_74, %c0_75], %205 {strides = array<i32>} : memref<8x8x32xf32, #tpu.memory_space<vmem>>, vector<1x8x32xf32>,
    %c5_i32 = arith.constant 5 : i32
    %206 = arith.index_cast %c5_i32 : i32 to index
    %c0_76 = arith.constant 0 : index
    %c0_77 = arith.constant 0 : index
    %207 = vector.load %arg2[%206, %c0_76, %c0_77] : memref<8x8x128xf32, #tpu.memory_space<vmem>>, vector<1x8x128xf32>
    %208 = vector.shape_cast %207 : vector<1x8x128xf32> to vector<8x128xf32>
    %cst_78 = arith.constant dense<0.000000e+00> : vector<8x128xf32>
    %209 = tpu.matmul %201, %3, %cst_78 {dimension_numbers = #tpu.dot_dimension_numbers<[1], [0], [0], [1], [0, 0, 1, 1], [], []>} : vector<8x32xf32>, vector<32x128xf32>, vector<8x128xf32> -> vector<8x128xf32>
    %210 = arith.addf %208, %209 : vector<8x128xf32>
    %211 = vector.extract_strided_slice %210 {offsets = [0, 0], sizes = [8, 32], strides = [1, 1]} : vector<8x128xf32> to vector<8x32xf32>
    %cst_79 = arith.constant 5.000000e-01 : f32
    %212 = vector.broadcast %cst_79 : f32 to vector<8x32xf32>
    %213 = arith.mulf %212, %211 : vector<8x32xf32>
    %214 = math.tanh %213 : vector<8x32xf32>
    %cst_80 = arith.constant 5.000000e-01 : f32
    %215 = vector.broadcast %cst_80 : f32 to vector<8x32xf32>
    %216 = arith.mulf %215, %214 : vector<8x32xf32>
    %cst_81 = arith.constant 5.000000e-01 : f32
    %217 = vector.broadcast %cst_81 : f32 to vector<8x32xf32>
    %218 = arith.addf %216, %217 : vector<8x32xf32>
    %219 = vector.extract_strided_slice %210 {offsets = [0, 32], sizes = [8, 32], strides = [1, 1]} : vector<8x128xf32> to vector<8x32xf32>
    %cst_82 = arith.constant 5.000000e-01 : f32
    %220 = vector.broadcast %cst_82 : f32 to vector<8x32xf32>
    %221 = arith.mulf %220, %219 : vector<8x32xf32>
    %222 = math.tanh %221 : vector<8x32xf32>
    %cst_83 = arith.constant 5.000000e-01 : f32
    %223 = vector.broadcast %cst_83 : f32 to vector<8x32xf32>
    %224 = arith.mulf %223, %222 : vector<8x32xf32>
    %cst_84 = arith.constant 5.000000e-01 : f32
    %225 = vector.broadcast %cst_84 : f32 to vector<8x32xf32>
    %226 = arith.addf %224, %225 : vector<8x32xf32>
    %227 = vector.extract_strided_slice %210 {offsets = [0, 64], sizes = [8, 32], strides = [1, 1]} : vector<8x128xf32> to vector<8x32xf32>
    %228 = math.tanh %227 : vector<8x32xf32>
    %229 = vector.extract_strided_slice %210 {offsets = [0, 96], sizes = [8, 32], strides = [1, 1]} : vector<8x128xf32> to vector<8x32xf32>
    %cst_85 = arith.constant 5.000000e-01 : f32
    %230 = vector.broadcast %cst_85 : f32 to vector<8x32xf32>
    %231 = arith.mulf %230, %229 : vector<8x32xf32>
    %232 = math.tanh %231 : vector<8x32xf32>
    %cst_86 = arith.constant 5.000000e-01 : f32
    %233 = vector.broadcast %cst_86 : f32 to vector<8x32xf32>
    %234 = arith.mulf %233, %232 : vector<8x32xf32>
    %cst_87 = arith.constant 5.000000e-01 : f32
    %235 = vector.broadcast %cst_87 : f32 to vector<8x32xf32>
    %236 = arith.addf %234, %235 : vector<8x32xf32>
    %237 = arith.mulf %226, %199 : vector<8x32xf32>
    %238 = arith.mulf %218, %228 : vector<8x32xf32>
    %239 = arith.addf %237, %238 : vector<8x32xf32>
    %240 = math.tanh %239 : vector<8x32xf32>
    %241 = arith.mulf %236, %240 : vector<8x32xf32>
    %242 = arith.index_cast %c5_i32 : i32 to index
    %c0_88 = arith.constant 0 : index
    %c0_89 = arith.constant 0 : index
    %243 = vector.load %arg4[%242, %c0_88, %c0_89] : memref<8x8x32xf32, #tpu.memory_space<vmem>>, vector<1x8x32xf32>
    %244 = vector.shape_cast %243 : vector<1x8x32xf32> to vector<8x32xf32>
    %245 = vector.shape_cast %241 : vector<8x32xf32> to vector<1x8x32xf32>
    tpu.vector_store %arg4[%242, %c0_88, %c0_89], %245 {strides = array<i32>} : memref<8x8x32xf32, #tpu.memory_space<vmem>>, vector<1x8x32xf32>,
    %c6_i32 = arith.constant 6 : i32
    %246 = arith.index_cast %c6_i32 : i32 to index
    %c0_90 = arith.constant 0 : index
    %c0_91 = arith.constant 0 : index
    %247 = vector.load %arg2[%246, %c0_90, %c0_91] : memref<8x8x128xf32, #tpu.memory_space<vmem>>, vector<1x8x128xf32>
    %248 = vector.shape_cast %247 : vector<1x8x128xf32> to vector<8x128xf32>
    %cst_92 = arith.constant dense<0.000000e+00> : vector<8x128xf32>
    %249 = tpu.matmul %241, %3, %cst_92 {dimension_numbers = #tpu.dot_dimension_numbers<[1], [0], [0], [1], [0, 0, 1, 1], [], []>} : vector<8x32xf32>, vector<32x128xf32>, vector<8x128xf32> -> vector<8x128xf32>
    %250 = arith.addf %248, %249 : vector<8x128xf32>
    %251 = vector.extract_strided_slice %250 {offsets = [0, 0], sizes = [8, 32], strides = [1, 1]} : vector<8x128xf32> to vector<8x32xf32>
    %cst_93 = arith.constant 5.000000e-01 : f32
    %252 = vector.broadcast %cst_93 : f32 to vector<8x32xf32>
    %253 = arith.mulf %252, %251 : vector<8x32xf32>
    %254 = math.tanh %253 : vector<8x32xf32>
    %cst_94 = arith.constant 5.000000e-01 : f32
    %255 = vector.broadcast %cst_94 : f32 to vector<8x32xf32>
    %256 = arith.mulf %255, %254 : vector<8x32xf32>
    %cst_95 = arith.constant 5.000000e-01 : f32
    %257 = vector.broadcast %cst_95 : f32 to vector<8x32xf32>
    %258 = arith.addf %256, %257 : vector<8x32xf32>
    %259 = vector.extract_strided_slice %250 {offsets = [0, 32], sizes = [8, 32], strides = [1, 1]} : vector<8x128xf32> to vector<8x32xf32>
    %cst_96 = arith.constant 5.000000e-01 : f32
    %260 = vector.broadcast %cst_96 : f32 to vector<8x32xf32>
    %261 = arith.mulf %260, %259 : vector<8x32xf32>
    %262 = math.tanh %261 : vector<8x32xf32>
    %cst_97 = arith.constant 5.000000e-01 : f32
    %263 = vector.broadcast %cst_97 : f32 to vector<8x32xf32>
    %264 = arith.mulf %263, %262 : vector<8x32xf32>
    %cst_98 = arith.constant 5.000000e-01 : f32
    %265 = vector.broadcast %cst_98 : f32 to vector<8x32xf32>
    %266 = arith.addf %264, %265 : vector<8x32xf32>
    %267 = vector.extract_strided_slice %250 {offsets = [0, 64], sizes = [8, 32], strides = [1, 1]} : vector<8x128xf32> to vector<8x32xf32>
    %268 = math.tanh %267 : vector<8x32xf32>
    %269 = vector.extract_strided_slice %250 {offsets = [0, 96], sizes = [8, 32], strides = [1, 1]} : vector<8x128xf32> to vector<8x32xf32>
    %cst_99 = arith.constant 5.000000e-01 : f32
    %270 = vector.broadcast %cst_99 : f32 to vector<8x32xf32>
    %271 = arith.mulf %270, %269 : vector<8x32xf32>
    %272 = math.tanh %271 : vector<8x32xf32>
    %cst_100 = arith.constant 5.000000e-01 : f32
    %273 = vector.broadcast %cst_100 : f32 to vector<8x32xf32>
    %274 = arith.mulf %273, %272 : vector<8x32xf32>
    %cst_101 = arith.constant 5.000000e-01 : f32
    %275 = vector.broadcast %cst_101 : f32 to vector<8x32xf32>
    %276 = arith.addf %274, %275 : vector<8x32xf32>
    %277 = arith.mulf %266, %239 : vector<8x32xf32>
    %278 = arith.mulf %258, %268 : vector<8x32xf32>
    %279 = arith.addf %277, %278 : vector<8x32xf32>
    %280 = math.tanh %279 : vector<8x32xf32>
    %281 = arith.mulf %276, %280 : vector<8x32xf32>
    %282 = arith.index_cast %c6_i32 : i32 to index
    %c0_102 = arith.constant 0 : index
    %c0_103 = arith.constant 0 : index
    %283 = vector.load %arg4[%282, %c0_102, %c0_103] : memref<8x8x32xf32, #tpu.memory_space<vmem>>, vector<1x8x32xf32>
    %284 = vector.shape_cast %283 : vector<1x8x32xf32> to vector<8x32xf32>
    %285 = vector.shape_cast %281 : vector<8x32xf32> to vector<1x8x32xf32>
    tpu.vector_store %arg4[%282, %c0_102, %c0_103], %285 {strides = array<i32>} : memref<8x8x32xf32, #tpu.memory_space<vmem>>, vector<1x8x32xf32>,
    %c7_i32 = arith.constant 7 : i32
    %286 = arith.index_cast %c7_i32 : i32 to index
    %c0_104 = arith.constant 0 : index
    %c0_105 = arith.constant 0 : index
    %287 = vector.load %arg2[%286, %c0_104, %c0_105] : memref<8x8x128xf32, #tpu.memory_space<vmem>>, vector<1x8x128xf32>
    %288 = vector.shape_cast %287 : vector<1x8x128xf32> to vector<8x128xf32>
    %cst_106 = arith.constant dense<0.000000e+00> : vector<8x128xf32>
    %289 = tpu.matmul %281, %3, %cst_106 {dimension_numbers = #tpu.dot_dimension_numbers<[1], [0], [0], [1], [0, 0, 1, 1], [], []>} : vector<8x32xf32>, vector<32x128xf32>, vector<8x128xf32> -> vector<8x128xf32>
    %290 = arith.addf %288, %289 : vector<8x128xf32>
    %291 = vector.extract_strided_slice %290 {offsets = [0, 0], sizes = [8, 32], strides = [1, 1]} : vector<8x128xf32> to vector<8x32xf32>
    %cst_107 = arith.constant 5.000000e-01 : f32
    %292 = vector.broadcast %cst_107 : f32 to vector<8x32xf32>
    %293 = arith.mulf %292, %291 : vector<8x32xf32>
    %294 = math.tanh %293 : vector<8x32xf32>
    %cst_108 = arith.constant 5.000000e-01 : f32
    %295 = vector.broadcast %cst_108 : f32 to vector<8x32xf32>
    %296 = arith.mulf %295, %294 : vector<8x32xf32>
    %cst_109 = arith.constant 5.000000e-01 : f32
    %297 = vector.broadcast %cst_109 : f32 to vector<8x32xf32>
    %298 = arith.addf %296, %297 : vector<8x32xf32>
    %299 = vector.extract_strided_slice %290 {offsets = [0, 32], sizes = [8, 32], strides = [1, 1]} : vector<8x128xf32> to vector<8x32xf32>
    %cst_110 = arith.constant 5.000000e-01 : f32
    %300 = vector.broadcast %cst_110 : f32 to vector<8x32xf32>
    %301 = arith.mulf %300, %299 : vector<8x32xf32>
    %302 = math.tanh %301 : vector<8x32xf32>
    %cst_111 = arith.constant 5.000000e-01 : f32
    %303 = vector.broadcast %cst_111 : f32 to vector<8x32xf32>
    %304 = arith.mulf %303, %302 : vector<8x32xf32>
    %cst_112 = arith.constant 5.000000e-01 : f32
    %305 = vector.broadcast %cst_112 : f32 to vector<8x32xf32>
    %306 = arith.addf %304, %305 : vector<8x32xf32>
    %307 = vector.extract_strided_slice %290 {offsets = [0, 64], sizes = [8, 32], strides = [1, 1]} : vector<8x128xf32> to vector<8x32xf32>
    %308 = math.tanh %307 : vector<8x32xf32>
    %309 = vector.extract_strided_slice %290 {offsets = [0, 96], sizes = [8, 32], strides = [1, 1]} : vector<8x128xf32> to vector<8x32xf32>
    %cst_113 = arith.constant 5.000000e-01 : f32
    %310 = vector.broadcast %cst_113 : f32 to vector<8x32xf32>
    %311 = arith.mulf %310, %309 : vector<8x32xf32>
    %312 = math.tanh %311 : vector<8x32xf32>
    %cst_114 = arith.constant 5.000000e-01 : f32
    %313 = vector.broadcast %cst_114 : f32 to vector<8x32xf32>
    %314 = arith.mulf %313, %312 : vector<8x32xf32>
    %cst_115 = arith.constant 5.000000e-01 : f32
    %315 = vector.broadcast %cst_115 : f32 to vector<8x32xf32>
    %316 = arith.addf %314, %315 : vector<8x32xf32>
    %317 = arith.mulf %306, %279 : vector<8x32xf32>
    %318 = arith.mulf %298, %308 : vector<8x32xf32>
    %319 = arith.addf %317, %318 : vector<8x32xf32>
    %320 = math.tanh %319 : vector<8x32xf32>
    %321 = arith.mulf %316, %320 : vector<8x32xf32>
    %322 = arith.index_cast %c7_i32 : i32 to index
    %c0_116 = arith.constant 0 : index
    %c0_117 = arith.constant 0 : index
    %323 = vector.load %arg4[%322, %c0_116, %c0_117] : memref<8x8x32xf32, #tpu.memory_space<vmem>>, vector<1x8x32xf32>
    %324 = vector.shape_cast %323 : vector<1x8x32xf32> to vector<8x32xf32>
    %325 = vector.shape_cast %321 : vector<8x32xf32> to vector<1x8x32xf32>
    tpu.vector_store %arg4[%322, %c0_116, %c0_117], %325 {strides = array<i32>} : memref<8x8x32xf32, #tpu.memory_space<vmem>>, vector<1x8x32xf32>,
    %c8_i32 = arith.constant 8 : i32
    %c0_118 = arith.constant 0 : index
    %c0_119 = arith.constant 0 : index
    %326 = vector.load %arg6[%c0_118, %c0_119] : memref<8x32xf32, #tpu.memory_space<vmem>>, vector<8x32xf32>
    tpu.vector_store %arg6[%c0_118, %c0_119], %321 {strides = array<i32>} : memref<8x32xf32, #tpu.memory_space<vmem>>, vector<8x32xf32>,
    %c0_120 = arith.constant 0 : index
    %c0_121 = arith.constant 0 : index
    %327 = vector.load %arg7[%c0_120, %c0_121] : memref<8x32xf32, #tpu.memory_space<vmem>>, vector<8x32xf32>
    tpu.vector_store %arg7[%c0_120, %c0_121], %319 {strides = array<i32>} : memref<8x32xf32, #tpu.memory_space<vmem>>, vector<8x32xf32>,
    return
  }
  func.func @transform_0(%arg0: i32, %arg1: i32) -> (i32, i32, i32) {
    %c0_i32 = arith.constant 0 : i32
    %c0_i32_0 = arith.constant 0 : i32
    return %arg1, %arg0, %c0_i32 : i32, i32, i32
  }
  func.func @transform_2(%arg0: i32, %arg1: i32) -> (i32, i32, i32) {
    %c0_i32 = arith.constant 0 : i32
    %c0_i32_0 = arith.constant 0 : i32
    return %arg1, %arg0, %c0_i32 : i32, i32, i32
  }
}

</mosaic_0001>

<llo_original>
// kernel: tpu_custom_call.1
$region0: #{tpu_custom_call.1}
  #allocation0 [shape = 'u32[]', space=smem, size = 0x4, offset = 0x4, fixed_abs, tag = 'smem constant byte address 0x4 - core index']
  #allocation1 [shape = 'u32[144,128]{1,0:T(1,128)}', space=vmem, size = 0x12000, scoped, tag = 'internal scratch']
  #allocation2 [shape = 'f32[32,128]{1,0:T(8,128)}', space=vmem, size = 0x4000, scoped, tag = 'scratch operand']
  #allocation3 [shape = 'f32[8,32]{1,0:T(8,128)}', space=vmem, size = 0x1000, scoped, tag = 'scratch operand']
  #allocation4 [shape = 'f32[8,32]{1,0:T(8,128)}', space=vmem, size = 0x1000, scoped, tag = 'scratch operand']
  #allocation5 [shape = 's32[1]{0}', space=sflag, size = 0x4, scoped, tag = 'scratch operand']
  #allocation10 [shape = 's32[]', space=sflag, size = 0x4, offset = 0, fixed_abs, tag = 'sflag constant byte address 0x0 - dummy sync flag']
  #allocation11 [shape = 's32[]', space=sflag, size = 0x4, offset = 0, fixed_abs, tag = 'sflag constant byte address 0x0 - dummy sync flag']
  #allocation12 [shape = 'u32[]', space=smem, size = 0x4, offset = 0x44, fixed_abs, tag = 'smem constant byte address 0x44 - assertion arg 0']
  #allocation13 [shape = 'u32[]', space=smem, size = 0x4, offset = 0x48, fixed_abs, tag = 'smem constant byte address 0x48 - assertion arg 1']
  %s0 = inlined_call_operand.hbm [shape: f32[8,8,128], index: 0, kind: input, shape index: {}]
  %s1 = inlined_call_operand.hbm [shape: f32[32,128], index: 1, kind: input, shape index: {}]
  %s2 = inlined_call_operand.hbm [shape: f32[8,8,32], index: 2, kind: output, shape index: {}]
  %s3 = sld [smem:[#allocation0]]
  $region26: #{tpu_custom_call.1} parent=0
    _
  %s5 = ssub.s32 1, %s3
  %s6 = scalar_select 0, %s5, %s3
  $region1: #{tpu_custom_call.1} parent=0
    #allocation6 [shape = 'u8[32768]{0}', space=vmem, size = 0x8000, scoped, tag = 'input window, operand 0, single buffered']
    #allocation7 [shape = 's32[1]{0}', space=sflag, size = 0x4, scoped, tag = 'scoped memory for tpu_custom_call.1']
    #allocation8 [shape = 's32[1]{0}', space=sflag, size = 0x4, scoped, tag = 'scoped memory for tpu_custom_call.1']
    #allocation9 [shape = 'u8[32768]{0}', space=vmem, size = 0x8000, scoped, tag = 'output window, operand 0, single buffered']
    %7 = vsyncpa [#allocation7], 0
    %8 = vsyncpa [#allocation8], 0
    // Predicated region
    $region2: #{tpu_custom_call.1} parent=1 // pred_check
      _
    $region3: #{tpu_custom_call.1} parent=1 // pred_check_branch
      %10 = sbr.rel (0) target = $region5
    $region4: #{tpu_custom_call.1} parent=1 // pred_region
      %s12 = ssub.s32 1024, 1024
      %13 = vsyncadd [#allocation7], %s12
      %s14 = sshll.u32 [#allocation6], 4
      %s15 = int_to_ptr.vmem [resolvable:$true] %s14
      %20 = dma.hbm_to_vmem [thread:$0]  %s0, 1024, %s15, [#allocation7], 128, 128, 8
    $region5: #{tpu_custom_call.1} parent=1 // pred_fallthru
      _
    // Predicated region
    $region6: #{tpu_custom_call.1} parent=1 // pred_check
      _
    $region7: #{tpu_custom_call.1} parent=1 // pred_check_branch
      %22 = sbr.rel (0) target = $region9
    $region8: #{tpu_custom_call.1} parent=1 // pred_region
      %23 = dma.done [#allocation7], 1024
    $region9: #{tpu_custom_call.1} parent=1 // pred_fallthru
      _
    %p24 = scmp.eq.s32.totalorder 0, 0
    // Predicated region
    $region10: #{tpu_custom_call.1} parent=1 // pred_check
      %p25 = pneg %p24
    $region11: #{tpu_custom_call.1} parent=1 // pred_check_branch
      %27 = sbr.rel (%p25) target = $region13
    $region12: #{tpu_custom_call.1} parent=1 // pred_region
      // Predicated region
      $region14: #{tpu_custom_call.1} parent=12 // pred_check
        _
      $region15: #{tpu_custom_call.1} parent=12 // pred_check_branch
        %29 = sbr.rel target = $region17
      $region16: #{tpu_custom_call.1} parent=12 // pred_region
        %30 = sst [smem:[#allocation12]] [#allocation11]
        %31 = sst [smem:[#allocation13]] [#allocation10]
      $region17: #{tpu_custom_call.1} parent=12 // pred_fallthru
        _
      %33 = shalt.err (0)
      %s35 = sshll.u32 [#allocation2], 4
      %s36 = int_to_ptr.vmem [resolvable:$true] %s35
      %38 = dma.hbm_to_vmem [thread:$0]  %s1, 512, %s36, [#allocation5]
      %vm39 = vcmask 261120
      %40 = vst.msk [vmem:[#allocation3] sm:$0xff] %vm39, 0.0
      %41 = vst.msk [vmem:[#allocation4] sm:$0xff] %vm39, 0.0
      %s42 = smul.u32 32, 1
      %s43 = sshll.u32 %s42, 4
      %44 = dma.done [#allocation5], %s43
    $region13: #{tpu_custom_call.1} parent=1 // pred_fallthru
      _
    %v45 = vld [vmem:[#allocation2] sm:$0xff]
    %v46 = vld [vmem:[#allocation2 + $0x8] sm:$0xff]
    %v47 = vld [vmem:[#allocation2 + $0x10] sm:$0xff]
    %v48 = vld [vmem:[#allocation2 + $0x18] sm:$0xff]
    %v49 = vld [vmem:[#allocation3] sm:$0xff]
    %v50 = vld [vmem:[#allocation4] sm:$0xff]
    %v51 = vld [vmem:[#allocation6] sm:$0xff]
    %vm52 = vcmask 261120
    %v54 = vsel %vm52, %v49, 0
    %56 = vmatprep.subr.mxu0 0.0
    %57 = vmatpush1.msra.mxu0 0.0
    %58 = vmatprep.subr.mxu0 0.0
    %59 = vmatpush1.msra.mxu0 0.0
    %60 = vmatprep.subr.mxu0 0.0
    %61 = vmatpush1.msra.mxu0 0.0
    %62 = vmatprep.subr.mxu0 0.0
    %63 = vmatpush1.msra.mxu0 0.0
    %64 = vmatprep.subr.mxu0 0.0
    %65 = vmatpush1.msra.mxu0 0.0
    %66 = vmatprep.subr.mxu0 0.0
    %67 = vmatpush1.msra.mxu0 0.0
    %68 = vmatprep.subr.mxu0 0.0
    %69 = vmatpush1.msra.mxu0 0.0
    %70 = vmatprep.subr.mxu0 0.0
    %71 = vmatpush1.msra.mxu0 0.0
    %72 = vmatprep.subr.mxu0 0.0
    %73 = vmatpush1.msra.mxu0 0.0
    %74 = vmatprep.subr.mxu0 0.0
    %75 = vmatpush1.msra.mxu0 0.0
    %76 = vmatprep.subr.mxu0 0.0
    %77 = vmatpush1.msra.mxu0 0.0
    %78 = vmatprep.subr.mxu0 0.0
    %79 = vmatpush1.msra.mxu0 0.0
    %80 = vmatprep.subr.mxu0 0.0
    %81 = vmatpush1.msra.mxu0 %v48
    %82 = vmatprep.subr.mxu0 0.0
    %83 = vmatpush1.msra.mxu0 %v47
    %84 = vmatprep.subr.mxu0 0.0
    %85 = vmatpush1.msra.mxu0 %v46
    %86 = vmatprep.subr.mxu0 0.0
    %87 = vmatpush1.msra.mxu0 %v45
    %88 = vmatprep.subr.mxu0 0.0
    %89 = vmatpush2.msra.mxu0 0.0
    %90 = vmatprep.subr.mxu0 0.0
    %91 = vmatpush2.msra.mxu0 0.0
    %92 = vmatprep.subr.mxu0 0.0
    %93 = vmatpush2.msra.mxu0 0.0
    %94 = vmatprep.subr.mxu0 0.0
    %95 = vmatpush2.msra.mxu0 0.0
    %96 = vmatprep.subr.mxu0 0.0
    %97 = vmatpush2.msra.mxu0 0.0
    %98 = vmatprep.subr.mxu0 0.0
    %99 = vmatpush2.msra.mxu0 0.0
    %100 = vmatprep.subr.mxu0 0.0
    %101 = vmatpush2.msra.mxu0 0.0
    %102 = vmatprep.subr.mxu0 0.0
    %103 = vmatpush2.msra.mxu0 0.0
    %104 = vmatprep.subr.mxu0 0.0
    %105 = vmatpush2.msra.mxu0 0.0
    %106 = vmatprep.subr.mxu0 0.0
    %107 = vmatpush2.msra.mxu0 0.0
    %108 = vmatprep.subr.mxu0 0.0
    %109 = vmatpush2.msra.mxu0 0.0
    %110 = vmatprep.subr.mxu0 0.0
    %111 = vmatpush2.msra.mxu0 0.0
    %112 = vmatprep.subr.mxu0 0.0
    %113 = vmatpush2.msra.mxu0 0.0
    %114 = vmatprep.subr.mxu0 0.0
    %115 = vmatpush2.msra.mxu0 0.0
    %116 = vmatprep.subr.mxu0 0.0
    %117 = vmatpush2.msra.mxu0 0.0
    %118 = vmatprep.subr.mxu0 0.0
    %119 = vmatpush2.msra.mxu0 0.0
    %120 = vmatprep.mubr.f32.mxu0 0.0
    %121 = vmatmul.mubr.f32.gmra.mxu0 %v54
    %v122 = vpop.f32.mrf.mxu0
    %v123 = vadd.f32 0.0, %v122
    %v124 = vpop.f32.mrf.mxu0
    %125 = vdwg.mxu0
    %v126 = vadd.f32 %v51, %v123
    %v127 = vmul.f32 %v126, 0.5
    %v128 = vtanh.pop %v127
    %v129 = vmul.f32 %v128, 0.5
    %v130 = vadd.f32 %v129, 0.5
    %v131 = vtanh.pop %v126
    %133 = vrot.lane.b32.xlu0 %v50, 32
    %v134 = vpop.permute.xlu0 %133
    %v136 = vmul.f32 %v130, %v134
    %138 = vrot.lane.b32.xlu0 %v131, 64
    %v139 = vpop.permute.xlu0 %138
    %v141 = vmul.f32 %v130, %v139
    %143 = vrot.lane.b32.xlu0 %v141, 32
    %v144 = vpop.permute.xlu0 %143
    %v146 = vadd.f32 %v136, %v144
    %v147 = vtanh.pop %v146
    %149 = vrot.lane.b32.xlu0 %v147, 64
    %v150 = vpop.permute.xlu0 %149
    %v152 = vmul.f32 %v130, %v150
    %154 = vrot.lane.b32.xlu0 %v152, 32
    %v155 = vpop.permute.xlu0 %154
    %157 = vst.msk [vmem:[#allocation9] sm:$0xff] %vm52, %v155
    %s158 = scalar_lea.vmem [#allocation6], 8
    %v159 = vld [vmem:[%s158] sm:$0xff]
    %v160 = vsel %vm52, %v155, 0
    %162 = vmatprep.subr.mxu0 0.0
    %163 = vmatpush1.msra.mxu0 0.0
    %164 = vmatprep.subr.mxu0 0.0
    %165 = vmatpush1.msra.mxu0 0.0
    %166 = vmatprep.subr.mxu0 0.0
    %167 = vmatpush1.msra.mxu0 0.0
    %168 = vmatprep.subr.mxu0 0.0
    %169 = vmatpush1.msra.mxu0 0.0
    %170 = vmatprep.subr.mxu0 0.0
    %171 = vmatpush1.msra.mxu0 0.0
    %172 = vmatprep.subr.mxu0 0.0
    %173 = vmatpush1.msra.mxu0 0.0
    %174 = vmatprep.subr.mxu0 0.0
    %175 = vmatpush1.msra.mxu0 0.0
    %176 = vmatprep.subr.mxu0 0.0
    %177 = vmatpush1.msra.mxu0 0.0
    %178 = vmatprep.subr.mxu0 0.0
    %179 = vmatpush1.msra.mxu0 0.0
    %180 = vmatprep.subr.mxu0 0.0
    %181 = vmatpush1.msra.mxu0 0.0
    %182 = vmatprep.subr.mxu0 0.0
    %183 = vmatpush1.msra.mxu0 0.0
    %184 = vmatprep.subr.mxu0 0.0
    %185 = vmatpush1.msra.mxu0 0.0
    %186 = vmatprep.subr.mxu0 0.0
    %187 = vmatpush1.msra.mxu0 %v48
    %188 = vmatprep.subr.mxu0 0.0
    %189 = vmatpush1.msra.mxu0 %v47
    %190 = vmatprep.subr.mxu0 0.0
    %191 = vmatpush1.msra.mxu0 %v46
    %192 = vmatprep.subr.mxu0 0.0
    %193 = vmatpush1.msra.mxu0 %v45
    %194 = vmatprep.subr.mxu0 0.0
    %195 = vmatpush2.msra.mxu0 0.0
    %196 = vmatprep.subr.mxu0 0.0
    %197 = vmatpush2.msra.mxu0 0.0
    %198 = vmatprep.subr.mxu0 0.0
    %199 = vmatpush2.msra.mxu0 0.0
    %200 = vmatprep.subr.mxu0 0.0
    %201 = vmatpush2.msra.mxu0 0.0
    %202 = vmatprep.subr.mxu0 0.0
    %203 = vmatpush2.msra.mxu0 0.0
    %204 = vmatprep.subr.mxu0 0.0
    %205 = vmatpush2.msra.mxu0 0.0
    %206 = vmatprep.subr.mxu0 0.0
    %207 = vmatpush2.msra.mxu0 0.0
    %208 = vmatprep.subr.mxu0 0.0
    %209 = vmatpush2.msra.mxu0 0.0
    %210 = vmatprep.subr.mxu0 0.0
    %211 = vmatpush2.msra.mxu0 0.0
    %212 = vmatprep.subr.mxu0 0.0
    %213 = vmatpush2.msra.mxu0 0.0
    %214 = vmatprep.subr.mxu0 0.0
    %215 = vmatpush2.msra.mxu0 0.0
    %216 = vmatprep.subr.mxu0 0.0
    %217 = vmatpush2.msra.mxu0 0.0
    %218 = vmatprep.subr.mxu0 0.0
    %219 = vmatpush2.msra.mxu0 0.0
    %220 = vmatprep.subr.mxu0 0.0
    %221 = vmatpush2.msra.mxu0 0.0
    %222 = vmatprep.subr.mxu0 0.0
    %223 = vmatpush2.msra.mxu0 0.0
    %224 = vmatprep.subr.mxu0 0.0
    %225 = vmatpush2.msra.mxu0 0.0
    %226 = vmatprep.mubr.f32.mxu0 0.0
    %227 = vmatmul.mubr.f32.gmra.mxu0 %v160
    %v228 = vpop.f32.mrf.mxu0
    %v229 = vadd.f32 0.0, %v228
    %v230 = vpop.f32.mrf.mxu0
    %231 = vdwg.mxu0
    %v232 = vadd.f32 %v159, %v229
    %v233 = vmul.f32 %v232, 0.5
    %v234 = vtanh.pop %v233
    %v235 = vmul.f32 %v234, 0.5
    %v236 = vadd.f32 %v235, 0.5
    %v237 = vtanh.pop %v232
    %v238 = vmul.f32 %v236, %v146
    %240 = vrot.lane.b32.xlu0 %v237, 64
    %v241 = vpop.permute.xlu0 %240
    %v243 = vmul.f32 %v236, %v241
    %245 = vrot.lane.b32.xlu0 %v243, 32
    %v246 = vpop.permute.xlu0 %245
    %v248 = vadd.f32 %v238, %v246
    %v249 = vtanh.pop %v248
    %251 = vrot.lane.b32.xlu0 %v249, 64
    %v252 = vpop.permute.xlu0 %251
    %v254 = vmul.f32 %v236, %v252
    %256 = vrot.lane.b32.xlu0 %v254, 32
    %v257 = vpop.permute.xlu0 %256
    %s259 = scalar_lea.vmem [#allocation9], 8
    %260 = vst.msk [vmem:[%s259] sm:$0xff] %vm52, %v257
    %s261 = scalar_lea.vmem [#allocation6], 16
    %v262 = vld [vmem:[%s261] sm:$0xff]
    %v263 = vsel %vm52, %v257, 0
    %265 = vmatprep.subr.mxu0 0.0
    %266 = vmatpush1.msra.mxu0 0.0
    %267 = vmatprep.subr.mxu0 0.0
    %268 = vmatpush1.msra.mxu0 0.0
    %269 = vmatprep.subr.mxu0 0.0
    %270 = vmatpush1.msra.mxu0 0.0
    %271 = vmatprep.subr.mxu0 0.0
    %272 = vmatpush1.msra.mxu0 0.0
    %273 = vmatprep.subr.mxu0 0.0
    %274 = vmatpush1.msra.mxu0 0.0
    %275 = vmatprep.subr.mxu0 0.0
    %276 = vmatpush1.msra.mxu0 0.0
    %277 = vmatprep.subr.mxu0 0.0
    %278 = vmatpush1.msra.mxu0 0.0
    %279 = vmatprep.subr.mxu0 0.0
    %280 = vmatpush1.msra.mxu0 0.0
    %281 = vmatprep.subr.mxu0 0.0
    %282 = vmatpush1.msra.mxu0 0.0
    %283 = vmatprep.subr.mxu0 0.0
    %284 = vmatpush1.msra.mxu0 0.0
    %285 = vmatprep.subr.mxu0 0.0
    %286 = vmatpush1.msra.mxu0 0.0
    %287 = vmatprep.subr.mxu0 0.0
    %288 = vmatpush1.msra.mxu0 0.0
    %289 = vmatprep.subr.mxu0 0.0
    %290 = vmatpush1.msra.mxu0 %v48
    %291 = vmatprep.subr.mxu0 0.0
    %292 = vmatpush1.msra.mxu0 %v47
    %293 = vmatprep.subr.mxu0 0.0
    %294 = vmatpush1.msra.mxu0 %v46
    %295 = vmatprep.subr.mxu0 0.0
    %296 = vmatpush1.msra.mxu0 %v45
    %297 = vmatprep.subr.mxu0 0.0
    %298 = vmatpush2.msra.mxu0 0.0
    %299 = vmatprep.subr.mxu0 0.0
    %300 = vmatpush2.msra.mxu0 0.0
    %301 = vmatprep.subr.mxu0 0.0
    %302 = vmatpush2.msra.mxu0 0.0
    %303 = vmatprep.subr.mxu0 0.0
    %304 = vmatpush2.msra.mxu0 0.0
    %305 = vmatprep.subr.mxu0 0.0
    %306 = vmatpush2.msra.mxu0 0.0
    %307 = vmatprep.subr.mxu0 0.0
    %308 = vmatpush2.msra.mxu0 0.0
    %309 = vmatprep.subr.mxu0 0.0
    %310 = vmatpush2.msra.mxu0 0.0
    %311 = vmatprep.subr.mxu0 0.0
    %312 = vmatpush2.msra.mxu0 0.0
    %313 = vmatprep.subr.mxu0 0.0
    %314 = vmatpush2.msra.mxu0 0.0
    %315 = vmatprep.subr.mxu0 0.0
    %316 = vmatpush2.msra.mxu0 0.0
    %317 = vmatprep.subr.mxu0 0.0
    %318 = vmatpush2.msra.mxu0 0.0
    %319 = vmatprep.subr.mxu0 0.0
    %320 = vmatpush2.msra.mxu0 0.0
    %321 = vmatprep.subr.mxu0 0.0
    %322 = vmatpush2.msra.mxu0 0.0
    %323 = vmatprep.subr.mxu0 0.0
    %324 = vmatpush2.msra.mxu0 0.0
    %325 = vmatprep.subr.mxu0 0.0
    %326 = vmatpush2.msra.mxu0 0.0
    %327 = vmatprep.subr.mxu0 0.0
    %328 = vmatpush2.msra.mxu0 0.0
    %329 = vmatprep.mubr.f32.mxu0 0.0
    %330 = vmatmul.mubr.f32.gmra.mxu0 %v263
    %v331 = vpop.f32.mrf.mxu0
    %v332 = vadd.f32 0.0, %v331
    %v333 = vpop.f32.mrf.mxu0
    %334 = vdwg.mxu0
    %v335 = vadd.f32 %v262, %v332
    %v336 = vmul.f32 %v335, 0.5
    %v337 = vtanh.pop %v336
    %v338 = vmul.f32 %v337, 0.5
    %v339 = vadd.f32 %v338, 0.5
    %v340 = vtanh.pop %v335
    %v341 = vmul.f32 %v339, %v248
    %343 = vrot.lane.b32.xlu0 %v340, 64
    %v344 = vpop.permute.xlu0 %343
    %v346 = vmul.f32 %v339, %v344
    %348 = vrot.lane.b32.xlu0 %v346, 32
    %v349 = vpop.permute.xlu0 %348
    %v351 = vadd.f32 %v341, %v349
    %v352 = vtanh.pop %v351
    %354 = vrot.lane.b32.xlu0 %v352, 64
    %v355 = vpop.permute.xlu0 %354
    %v357 = vmul.f32 %v339, %v355
    %359 = vrot.lane.b32.xlu0 %v357, 32
    %v360 = vpop.permute.xlu0 %359
    %s362 = scalar_lea.vmem [#allocation9], 16
    %363 = vst.msk [vmem:[%s362] sm:$0xff] %vm52, %v360
    %s364 = scalar_lea.vmem [#allocation6], 24
    %v365 = vld [vmem:[%s364] sm:$0xff]
    %v366 = vsel %vm52, %v360, 0
    %368 = vmatprep.subr.mxu0 0.0
    %369 = vmatpush1.msra.mxu0 0.0
    %370 = vmatprep.subr.mxu0 0.0
    %371 = vmatpush1.msra.mxu0 0.0
    %372 = vmatprep.subr.mxu0 0.0
    %373 = vmatpush1.msra.mxu0 0.0
    %374 = vmatprep.subr.mxu0 0.0
    %375 = vmatpush1.msra.mxu0 0.0
    %376 = vmatprep.subr.mxu0 0.0
    %377 = vmatpush1.msra.mxu0 0.0
    %378 = vmatprep.subr.mxu0 0.0
    %379 = vmatpush1.msra.mxu0 0.0
    %380 = vmatprep.subr.mxu0 0.0
    %381 = vmatpush1.msra.mxu0 0.0
    %382 = vmatprep.subr.mxu0 0.0
    %383 = vmatpush1.msra.mxu0 0.0
    %384 = vmatprep.subr.mxu0 0.0
    %385 = vmatpush1.msra.mxu0 0.0
    %386 = vmatprep.subr.mxu0 0.0
    %387 = vmatpush1.msra.mxu0 0.0
    %388 = vmatprep.subr.mxu0 0.0
    %389 = vmatpush1.msra.mxu0 0.0
    %390 = vmatprep.subr.mxu0 0.0
    %391 = vmatpush1.msra.mxu0 0.0
    %392 = vmatprep.subr.mxu0 0.0
    %393 = vmatpush1.msra.mxu0 %v48
    %394 = vmatprep.subr.mxu0 0.0
    %395 = vmatpush1.msra.mxu0 %v47
    %396 = vmatprep.subr.mxu0 0.0
    %397 = vmatpush1.msra.mxu0 %v46
    %398 = vmatprep.subr.mxu0 0.0
    %399 = vmatpush1.msra.mxu0 %v45
    %400 = vmatprep.subr.mxu0 0.0
    %401 = vmatpush2.msra.mxu0 0.0
    %402 = vmatprep.subr.mxu0 0.0
    %403 = vmatpush2.msra.mxu0 0.0
    %404 = vmatprep.subr.mxu0 0.0
    %405 = vmatpush2.msra.mxu0 0.0
    %406 = vmatprep.subr.mxu0 0.0
    %407 = vmatpush2.msra.mxu0 0.0
    %408 = vmatprep.subr.mxu0 0.0
    %409 = vmatpush2.msra.mxu0 0.0
    %410 = vmatprep.subr.mxu0 0.0
    %411 = vmatpush2.msra.mxu0 0.0
    %412 = vmatprep.subr.mxu0 0.0
    %413 = vmatpush2.msra.mxu0 0.0
    %414 = vmatprep.subr.mxu0 0.0
    %415 = vmatpush2.msra.mxu0 0.0
    %416 = vmatprep.subr.mxu0 0.0
    %417 = vmatpush2.msra.mxu0 0.0
    %418 = vmatprep.subr.mxu0 0.0
    %419 = vmatpush2.msra.mxu0 0.0
    %420 = vmatprep.subr.mxu0 0.0
    %421 = vmatpush2.msra.mxu0 0.0
    %422 = vmatprep.subr.mxu0 0.0
    %423 = vmatpush2.msra.mxu0 0.0
    %424 = vmatprep.subr.mxu0 0.0
    %425 = vmatpush2.msra.mxu0 0.0
    %426 = vmatprep.subr.mxu0 0.0
    %427 = vmatpush2.msra.mxu0 0.0
    %428 = vmatprep.subr.mxu0 0.0
    %429 = vmatpush2.msra.mxu0 0.0
    %430 = vmatprep.subr.mxu0 0.0
    %431 = vmatpush2.msra.mxu0 0.0
    %432 = vmatprep.mubr.f32.mxu0 0.0
    %433 = vmatmul.mubr.f32.gmra.mxu0 %v366
    %v434 = vpop.f32.mrf.mxu0
    %v435 = vadd.f32 0.0, %v434
    %v436 = vpop.f32.mrf.mxu0
    %437 = vdwg.mxu0
    %v438 = vadd.f32 %v365, %v435
    %v439 = vmul.f32 %v438, 0.5
    %v440 = vtanh.pop %v439
    %v441 = vmul.f32 %v440, 0.5
    %v442 = vadd.f32 %v441, 0.5
    %v443 = vtanh.pop %v438
    %v444 = vmul.f32 %v442, %v351
    %446 = vrot.lane.b32.xlu0 %v443, 64
    %v447 = vpop.permute.xlu0 %446
    %v449 = vmul.f32 %v442, %v447
    %451 = vrot.lane.b32.xlu0 %v449, 32
    %v452 = vpop.permute.xlu0 %451
    %v454 = vadd.f32 %v444, %v452
    %v455 = vtanh.pop %v454
    %457 = vrot.lane.b32.xlu0 %v455, 64
    %v458 = vpop.permute.xlu0 %457
    %v460 = vmul.f32 %v442, %v458
    %462 = vrot.lane.b32.xlu0 %v460, 32
    %v463 = vpop.permute.xlu0 %462
    %s465 = scalar_lea.vmem [#allocation9], 24
    %466 = vst.msk [vmem:[%s465] sm:$0xff] %vm52, %v463
    %s467 = scalar_lea.vmem [#allocation6], 32
    %v468 = vld [vmem:[%s467] sm:$0xff]
    %v469 = vsel %vm52, %v463, 0
    %471 = vmatprep.subr.mxu0 0.0
    %472 = vmatpush1.msra.mxu0 0.0
    %473 = vmatprep.subr.mxu0 0.0
    %474 = vmatpush1.msra.mxu0 0.0
    %475 = vmatprep.subr.mxu0 0.0
    %476 = vmatpush1.msra.mxu0 0.0
    %477 = vmatprep.subr.mxu0 0.0
    %478 = vmatpush1.msra.mxu0 0.0
    %479 = vmatprep.subr.mxu0 0.0
    %480 = vmatpush1.msra.mxu0 0.0
    %481 = vmatprep.subr.mxu0 0.0
    %482 = vmatpush1.msra.mxu0 0.0
    %483 = vmatprep.subr.mxu0 0.0
    %484 = vmatpush1.msra.mxu0 0.0
    %485 = vmatprep.subr.mxu0 0.0
    %486 = vmatpush1.msra.mxu0 0.0
    %487 = vmatprep.subr.mxu0 0.0
    %488 = vmatpush1.msra.mxu0 0.0
    %489 = vmatprep.subr.mxu0 0.0
    %490 = vmatpush1.msra.mxu0 0.0
    %491 = vmatprep.subr.mxu0 0.0
    %492 = vmatpush1.msra.mxu0 0.0
    %493 = vmatprep.subr.mxu0 0.0
    %494 = vmatpush1.msra.mxu0 0.0
    %495 = vmatprep.subr.mxu0 0.0
    %496 = vmatpush1.msra.mxu0 %v48
    %497 = vmatprep.subr.mxu0 0.0
    %498 = vmatpush1.msra.mxu0 %v47
    %499 = vmatprep.subr.mxu0 0.0
    %500 = vmatpush1.msra.mxu0 %v46
    %501 = vmatprep.subr.mxu0 0.0
    %502 = vmatpush1.msra.mxu0 %v45
    %503 = vmatprep.subr.mxu0 0.0
    %504 = vmatpush2.msra.mxu0 0.0
    %505 = vmatprep.subr.mxu0 0.0
    %506 = vmatpush2.msra.mxu0 0.0
    %507 = vmatprep.subr.mxu0 0.0
    %508 = vmatpush2.msra.mxu0 0.0
    %509 = vmatprep.subr.mxu0 0.0
    %510 = vmatpush2.msra.mxu0 0.0
    %511 = vmatprep.subr.mxu0 0.0
    %512 = vmatpush2.msra.mxu0 0.0
    %513 = vmatprep.subr.mxu0 0.0
    %514 = vmatpush2.msra.mxu0 0.0
    %515 = vmatprep.subr.mxu0 0.0
    %516 = vmatpush2.msra.mxu0 0.0
    %517 = vmatprep.subr.mxu0 0.0
    %518 = vmatpush2.msra.mxu0 0.0
    %519 = vmatprep.subr.mxu0 0.0
    %520 = vmatpush2.msra.mxu0 0.0
    %521 = vmatprep.subr.mxu0 0.0
    %522 = vmatpush2.msra.mxu0 0.0
    %523 = vmatprep.subr.mxu0 0.0
    %524 = vmatpush2.msra.mxu0 0.0
    %525 = vmatprep.subr.mxu0 0.0
    %526 = vmatpush2.msra.mxu0 0.0
    %527 = vmatprep.subr.mxu0 0.0
    %528 = vmatpush2.msra.mxu0 0.0
    %529 = vmatprep.subr.mxu0 0.0
    %530 = vmatpush2.msra.mxu0 0.0
    %531 = vmatprep.subr.mxu0 0.0
    %532 = vmatpush2.msra.mxu0 0.0
    %533 = vmatprep.subr.mxu0 0.0
    %534 = vmatpush2.msra.mxu0 0.0
    %535 = vmatprep.mubr.f32.mxu0 0.0
    %536 = vmatmul.mubr.f32.gmra.mxu0 %v469
    %v537 = vpop.f32.mrf.mxu0
    %v538 = vadd.f32 0.0, %v537
    %v539 = vpop.f32.mrf.mxu0
    %540 = vdwg.mxu0
    %v541 = vadd.f32 %v468, %v538
    %v542 = vmul.f32 %v541, 0.5
    %v543 = vtanh.pop %v542
    %v544 = vmul.f32 %v543, 0.5
    %v545 = vadd.f32 %v544, 0.5
    %v546 = vtanh.pop %v541
    %v547 = vmul.f32 %v545, %v454
    %549 = vrot.lane.b32.xlu0 %v546, 64
    %v550 = vpop.permute.xlu0 %549
    %v552 = vmul.f32 %v545, %v550
    %554 = vrot.lane.b32.xlu0 %v552, 32
    %v555 = vpop.permute.xlu0 %554
    %v557 = vadd.f32 %v547, %v555
    %v558 = vtanh.pop %v557
    %560 = vrot.lane.b32.xlu0 %v558, 64
    %v561 = vpop.permute.xlu0 %560
    %v563 = vmul.f32 %v545, %v561
    %565 = vrot.lane.b32.xlu0 %v563, 32
    %v566 = vpop.permute.xlu0 %565
    %s568 = scalar_lea.vmem [#allocation9], 32
    %569 = vst.msk [vmem:[%s568] sm:$0xff] %vm52, %v566
    %s570 = scalar_lea.vmem [#allocation6], 40
    %v571 = vld [vmem:[%s570] sm:$0xff]
    %v572 = vsel %vm52, %v566, 0
    %574 = vmatprep.subr.mxu0 0.0
    %575 = vmatpush1.msra.mxu0 0.0
    %576 = vmatprep.subr.mxu0 0.0
    %577 = vmatpush1.msra.mxu0 0.0
    %578 = vmatprep.subr.mxu0 0.0
    %579 = vmatpush1.msra.mxu0 0.0
    %580 = vmatprep.subr.mxu0 0.0
    %581 = vmatpush1.msra.mxu0 0.0
    %582 = vmatprep.subr.mxu0 0.0
    %583 = vmatpush1.msra.mxu0 0.0
    %584 = vmatprep.subr.mxu0 0.0
    %585 = vmatpush1.msra.mxu0 0.0
    %586 = vmatprep.subr.mxu0 0.0
    %587 = vmatpush1.msra.mxu0 0.0
    %588 = vmatprep.subr.mxu0 0.0
    %589 = vmatpush1.msra.mxu0 0.0
    %590 = vmatprep.subr.mxu0 0.0
    %591 = vmatpush1.msra.mxu0 0.0
    %592 = vmatprep.subr.mxu0 0.0
    %593 = vmatpush1.msra.mxu0 0.0
    %594 = vmatprep.subr.mxu0 0.0
    %595 = vmatpush1.msra.mxu0 0.0
    %596 = vmatprep.subr.mxu0 0.0
    %597 = vmatpush1.msra.mxu0 0.0
    %598 = vmatprep.subr.mxu0 0.0
    %599 = vmatpush1.msra.mxu0 %v48
    %600 = vmatprep.subr.mxu0 0.0
    %601 = vmatpush1.msra.mxu0 %v47
    %602 = vmatprep.subr.mxu0 0.0
    %603 = vmatpush1.msra.mxu0 %v46
    %604 = vmatprep.subr.mxu0 0.0
    %605 = vmatpush1.msra.mxu0 %v45
    %606 = vmatprep.subr.mxu0 0.0
    %607 = vmatpush2.msra.mxu0 0.0
    %608 = vmatprep.subr.mxu0 0.0
    %609 = vmatpush2.msra.mxu0 0.0
    %610 = vmatprep.subr.mxu0 0.0
    %611 = vmatpush2.msra.mxu0 0.0
    %612 = vmatprep.subr.mxu0 0.0
    %613 = vmatpush2.msra.mxu0 0.0
    %614 = vmatprep.subr.mxu0 0.0
    %615 = vmatpush2.msra.mxu0 0.0
    %616 = vmatprep.subr.mxu0 0.0
    %617 = vmatpush2.msra.mxu0 0.0
    %618 = vmatprep.subr.mxu0 0.0
    %619 = vmatpush2.msra.mxu0 0.0
    %620 = vmatprep.subr.mxu0 0.0
    %621 = vmatpush2.msra.mxu0 0.0
    %622 = vmatprep.subr.mxu0 0.0
    %623 = vmatpush2.msra.mxu0 0.0
    %624 = vmatprep.subr.mxu0 0.0
    %625 = vmatpush2.msra.mxu0 0.0
    %626 = vmatprep.subr.mxu0 0.0
    %627 = vmatpush2.msra.mxu0 0.0
    %628 = vmatprep.subr.mxu0 0.0
    %629 = vmatpush2.msra.mxu0 0.0
    %630 = vmatprep.subr.mxu0 0.0
    %631 = vmatpush2.msra.mxu0 0.0
    %632 = vmatprep.subr.mxu0 0.0
    %633 = vmatpush2.msra.mxu0 0.0
    %634 = vmatprep.subr.mxu0 0.0
    %635 = vmatpush2.msra.mxu0 0.0
    %636 = vmatprep.subr.mxu0 0.0
    %637 = vmatpush2.msra.mxu0 0.0
    %638 = vmatprep.mubr.f32.mxu0 0.0
    %639 = vmatmul.mubr.f32.gmra.mxu0 %v572
    %v640 = vpop.f32.mrf.mxu0
    %v641 = vadd.f32 0.0, %v640
    %v642 = vpop.f32.mrf.mxu0
    %643 = vdwg.mxu0
    %v644 = vadd.f32 %v571, %v641
    %v645 = vmul.f32 %v644, 0.5
    %v646 = vtanh.pop %v645
    %v647 = vmul.f32 %v646, 0.5
    %v648 = vadd.f32 %v647, 0.5
    %v649 = vtanh.pop %v644
    %v650 = vmul.f32 %v648, %v557
    %652 = vrot.lane.b32.xlu0 %v649, 64
    %v653 = vpop.permute.xlu0 %652
    %v655 = vmul.f32 %v648, %v653
    %657 = vrot.lane.b32.xlu0 %v655, 32
    %v658 = vpop.permute.xlu0 %657
    %v660 = vadd.f32 %v650, %v658
    %v661 = vtanh.pop %v660
    %663 = vrot.lane.b32.xlu0 %v661, 64
    %v664 = vpop.permute.xlu0 %663
    %v666 = vmul.f32 %v648, %v664
    %668 = vrot.lane.b32.xlu0 %v666, 32
    %v669 = vpop.permute.xlu0 %668
    %s671 = scalar_lea.vmem [#allocation9], 40
    %672 = vst.msk [vmem:[%s671] sm:$0xff] %vm52, %v669
    %s673 = scalar_lea.vmem [#allocation6], 48
    %v674 = vld [vmem:[%s673] sm:$0xff]
    %v675 = vsel %vm52, %v669, 0
    %677 = vmatprep.subr.mxu0 0.0
    %678 = vmatpush1.msra.mxu0 0.0
    %679 = vmatprep.subr.mxu0 0.0
    %680 = vmatpush1.msra.mxu0 0.0
    %681 = vmatprep.subr.mxu0 0.0
    %682 = vmatpush1.msra.mxu0 0.0
    %683 = vmatprep.subr.mxu0 0.0
    %684 = vmatpush1.msra.mxu0 0.0
    %685 = vmatprep.subr.mxu0 0.0
    %686 = vmatpush1.msra.mxu0 0.0
    %687 = vmatprep.subr.mxu0 0.0
    %688 = vmatpush1.msra.mxu0 0.0
    %689 = vmatprep.subr.mxu0 0.0
    %690 = vmatpush1.msra.mxu0 0.0
    %691 = vmatprep.subr.mxu0 0.0
    %692 = vmatpush1.msra.mxu0 0.0
    %693 = vmatprep.subr.mxu0 0.0
    %694 = vmatpush1.msra.mxu0 0.0
    %695 = vmatprep.subr.mxu0 0.0
    %696 = vmatpush1.msra.mxu0 0.0
    %697 = vmatprep.subr.mxu0 0.0
    %698 = vmatpush1.msra.mxu0 0.0
    %699 = vmatprep.subr.mxu0 0.0
    %700 = vmatpush1.msra.mxu0 0.0
    %701 = vmatprep.subr.mxu0 0.0
    %702 = vmatpush1.msra.mxu0 %v48
    %703 = vmatprep.subr.mxu0 0.0
    %704 = vmatpush1.msra.mxu0 %v47
    %705 = vmatprep.subr.mxu0 0.0
    %706 = vmatpush1.msra.mxu0 %v46
    %707 = vmatprep.subr.mxu0 0.0
    %708 = vmatpush1.msra.mxu0 %v45
    %709 = vmatprep.subr.mxu0 0.0
    %710 = vmatpush2.msra.mxu0 0.0
    %711 = vmatprep.subr.mxu0 0.0
    %712 = vmatpush2.msra.mxu0 0.0
    %713 = vmatprep.subr.mxu0 0.0
    %714 = vmatpush2.msra.mxu0 0.0
    %715 = vmatprep.subr.mxu0 0.0
    %716 = vmatpush2.msra.mxu0 0.0
    %717 = vmatprep.subr.mxu0 0.0
    %718 = vmatpush2.msra.mxu0 0.0
    %719 = vmatprep.subr.mxu0 0.0
    %720 = vmatpush2.msra.mxu0 0.0
    %721 = vmatprep.subr.mxu0 0.0
    %722 = vmatpush2.msra.mxu0 0.0
    %723 = vmatprep.subr.mxu0 0.0
    %724 = vmatpush2.msra.mxu0 0.0
    %725 = vmatprep.subr.mxu0 0.0
    %726 = vmatpush2.msra.mxu0 0.0
    %727 = vmatprep.subr.mxu0 0.0
    %728 = vmatpush2.msra.mxu0 0.0
    %729 = vmatprep.subr.mxu0 0.0
    %730 = vmatpush2.msra.mxu0 0.0
    %731 = vmatprep.subr.mxu0 0.0
    %732 = vmatpush2.msra.mxu0 0.0
    %733 = vmatprep.subr.mxu0 0.0
    %734 = vmatpush2.msra.mxu0 0.0
    %735 = vmatprep.subr.mxu0 0.0
    %736 = vmatpush2.msra.mxu0 0.0
    %737 = vmatprep.subr.mxu0 0.0
    %738 = vmatpush2.msra.mxu0 0.0
    %739 = vmatprep.subr.mxu0 0.0
    %740 = vmatpush2.msra.mxu0 0.0
    %741 = vmatprep.mubr.f32.mxu0 0.0
    %742 = vmatmul.mubr.f32.gmra.mxu0 %v675
    %v743 = vpop.f32.mrf.mxu0
    %v744 = vadd.f32 0.0, %v743
    %v745 = vpop.f32.mrf.mxu0
    %746 = vdwg.mxu0
    %v747 = vadd.f32 %v674, %v744
    %v748 = vmul.f32 %v747, 0.5
    %v749 = vtanh.pop %v748
    %v750 = vmul.f32 %v749, 0.5
    %v751 = vadd.f32 %v750, 0.5
    %v752 = vtanh.pop %v747
    %v753 = vmul.f32 %v751, %v660
    %755 = vrot.lane.b32.xlu0 %v752, 64
    %v756 = vpop.permute.xlu0 %755
    %v758 = vmul.f32 %v751, %v756
    %760 = vrot.lane.b32.xlu0 %v758, 32
    %v761 = vpop.permute.xlu0 %760
    %v763 = vadd.f32 %v753, %v761
    %v764 = vtanh.pop %v763
    %766 = vrot.lane.b32.xlu0 %v764, 64
    %v767 = vpop.permute.xlu0 %766
    %v769 = vmul.f32 %v751, %v767
    %771 = vrot.lane.b32.xlu0 %v769, 32
    %v772 = vpop.permute.xlu0 %771
    %s774 = scalar_lea.vmem [#allocation9], 48
    %775 = vst.msk [vmem:[%s774] sm:$0xff] %vm52, %v772
    %s776 = scalar_lea.vmem [#allocation6], 56
    %v777 = vld [vmem:[%s776] sm:$0xff]
    %v778 = vsel %vm52, %v772, 0
    %780 = vmatprep.subr.mxu0 0.0
    %781 = vmatpush1.msra.mxu0 0.0
    %782 = vmatprep.subr.mxu0 0.0
    %783 = vmatpush1.msra.mxu0 0.0
    %784 = vmatprep.subr.mxu0 0.0
    %785 = vmatpush1.msra.mxu0 0.0
    %786 = vmatprep.subr.mxu0 0.0
    %787 = vmatpush1.msra.mxu0 0.0
    %788 = vmatprep.subr.mxu0 0.0
    %789 = vmatpush1.msra.mxu0 0.0
    %790 = vmatprep.subr.mxu0 0.0
    %791 = vmatpush1.msra.mxu0 0.0
    %792 = vmatprep.subr.mxu0 0.0
    %793 = vmatpush1.msra.mxu0 0.0
    %794 = vmatprep.subr.mxu0 0.0
    %795 = vmatpush1.msra.mxu0 0.0
    %796 = vmatprep.subr.mxu0 0.0
    %797 = vmatpush1.msra.mxu0 0.0
    %798 = vmatprep.subr.mxu0 0.0
    %799 = vmatpush1.msra.mxu0 0.0
    %800 = vmatprep.subr.mxu0 0.0
    %801 = vmatpush1.msra.mxu0 0.0
    %802 = vmatprep.subr.mxu0 0.0
    %803 = vmatpush1.msra.mxu0 0.0
    %804 = vmatprep.subr.mxu0 0.0
    %805 = vmatpush1.msra.mxu0 %v48
    %806 = vmatprep.subr.mxu0 0.0
    %807 = vmatpush1.msra.mxu0 %v47
    %808 = vmatprep.subr.mxu0 0.0
    %809 = vmatpush1.msra.mxu0 %v46
    %810 = vmatprep.subr.mxu0 0.0
    %811 = vmatpush1.msra.mxu0 %v45
    %812 = vmatprep.subr.mxu0 0.0
    %813 = vmatpush2.msra.mxu0 0.0
    %814 = vmatprep.subr.mxu0 0.0
    %815 = vmatpush2.msra.mxu0 0.0
    %816 = vmatprep.subr.mxu0 0.0
    %817 = vmatpush2.msra.mxu0 0.0
    %818 = vmatprep.subr.mxu0 0.0
    %819 = vmatpush2.msra.mxu0 0.0
    %820 = vmatprep.subr.mxu0 0.0
    %821 = vmatpush2.msra.mxu0 0.0
    %822 = vmatprep.subr.mxu0 0.0
    %823 = vmatpush2.msra.mxu0 0.0
    %824 = vmatprep.subr.mxu0 0.0
    %825 = vmatpush2.msra.mxu0 0.0
    %826 = vmatprep.subr.mxu0 0.0
    %827 = vmatpush2.msra.mxu0 0.0
    %828 = vmatprep.subr.mxu0 0.0
    %829 = vmatpush2.msra.mxu0 0.0
    %830 = vmatprep.subr.mxu0 0.0
    %831 = vmatpush2.msra.mxu0 0.0
    %832 = vmatprep.subr.mxu0 0.0
    %833 = vmatpush2.msra.mxu0 0.0
    %834 = vmatprep.subr.mxu0 0.0
    %835 = vmatpush2.msra.mxu0 0.0
    %836 = vmatprep.subr.mxu0 0.0
    %837 = vmatpush2.msra.mxu0 0.0
    %838 = vmatprep.subr.mxu0 0.0
    %839 = vmatpush2.msra.mxu0 0.0
    %840 = vmatprep.subr.mxu0 0.0
    %841 = vmatpush2.msra.mxu0 0.0
    %842 = vmatprep.subr.mxu0 0.0
    %843 = vmatpush2.msra.mxu0 0.0
    %844 = vmatprep.mubr.f32.mxu0 0.0
    %845 = vmatmul.mubr.f32.gmra.mxu0 %v778
    %v846 = vpop.f32.mrf.mxu0
    %v847 = vadd.f32 0.0, %v846
    %v848 = vpop.f32.mrf.mxu0
    %849 = vdwg.mxu0
    %v850 = vadd.f32 %v777, %v847
    %v851 = vmul.f32 %v850, 0.5
    %v852 = vtanh.pop %v851
    %v853 = vmul.f32 %v852, 0.5
    %v854 = vadd.f32 %v853, 0.5
    %v855 = vtanh.pop %v850
    %v856 = vmul.f32 %v854, %v763
    %858 = vrot.lane.b32.xlu0 %v855, 64
    %v859 = vpop.permute.xlu0 %858
    %v861 = vmul.f32 %v854, %v859
    %863 = vrot.lane.b32.xlu0 %v861, 32
    %v864 = vpop.permute.xlu0 %863
    %v866 = vadd.f32 %v856, %v864
    %v867 = vtanh.pop %v866
    %869 = vrot.lane.b32.xlu0 %v867, 64
    %v870 = vpop.permute.xlu0 %869
    %v872 = vmul.f32 %v854, %v870
    %874 = vrot.lane.b32.xlu0 %v872, 32
    %v875 = vpop.permute.xlu0 %874
    %s877 = scalar_lea.vmem [#allocation9], 56
    %878 = vst.msk [vmem:[%s877] sm:$0xff] %vm52, %v875
    %879 = vst.msk [vmem:[#allocation3] sm:$0xff] %vm52, %v875
    %881 = vrot.lane.b32.xlu0 %v866, 96
    %v882 = vpop.permute.xlu0 %881
    %884 = vst.msk [vmem:[#allocation4] sm:$0xff] %vm52, %v882
    // Predicated region
    $region18: #{tpu_custom_call.1} parent=1 // pred_check
      _
    $region19: #{tpu_custom_call.1} parent=1 // pred_check_branch
      %886 = sbr.rel (0) target = $region21
    $region20: #{tpu_custom_call.1} parent=1 // pred_region
      %s888 = ssub.s32 1024, 1024
      %889 = vsyncadd [#allocation8], %s888
      %s890 = sshll.u32 [#allocation9], 4
      %s891 = int_to_ptr.vmem [resolvable:$true] %s890
      %896 = dma.vmem_to_hbm [thread:$0]  %s891, 1024, %s2, [#allocation8], 128, 128, 8
    $region21: #{tpu_custom_call.1} parent=1 // pred_fallthru
      _
    // Predicated region
    $region22: #{tpu_custom_call.1} parent=1 // pred_check
      _
    $region23: #{tpu_custom_call.1} parent=1 // pred_check_branch
      %898 = sbr.rel (0) target = $region25
    $region24: #{tpu_custom_call.1} parent=1 // pred_region
      %899 = dma.done [#allocation8], 1024
    $region25: #{tpu_custom_call.1} parent=1 // pred_fallthru
      _
    %900 = vsyncpa [#allocation7], 1
    %901 = vsyncpa [#allocation8], 1
  %902 = vsyncmov [#allocation5]
  %s903 = vpop.sfrf %902
  %p904 = scmp.eq.s32.totalorder %s903, 0
  %p905 = pneg %p904
  %907 = shalt.err (%p905)

</llo_original>
